<compile_context>
chip_gen: v6e
topology: v6e:2x2x1
jax: 0.10.0
libtpu: 0.0.40
codegen_flags: <defaults>
</compile_context>

<pallas_src>
import functools

import jax
import jax.numpy as jnp
from jax.experimental import pallas as pl
from jax.experimental.pallas import tpu as pltpu


def _sigmoid(x):
    # tanh-form sigmoid: a single EUP tanh pass (vs. exp + divide).
    return 0.5 * (jnp.tanh(0.5 * x) + 1.0)


def bilstm_kernel(xf_ref, xb_ref,                  # (Tc, Bt, I) fwd / bwd x chunk
                  wih_f_ref, whh_f_ref, b_f_ref,   # (I,4H), (H,4H), (1,4H) fwd
                  wih_b_ref, whh_b_ref, b_b_ref,   # same, bwd
                  of_ref, ob_ref,                  # (Tc, Bt, H) fwd / bwd hidden out
                  gxf_ref, gxb_ref,                # (Tc, Bt, 4H) hoisted projections
                  hf_ref, cf_ref, hb_ref, cb_ref,  # (Bt, H) recurrent state
                  *, unroll):
    ci = pl.program_id(1)          # chunk counter — MUST be the innermost grid axis
    Tc, Bt, I = xf_ref.shape
    H = hf_ref.shape[1]
    G = 4 * H

    # PyTorch default h0 = c0 = 0; reset at the first chunk of every batch tile.
    @pl.when(ci == 0)
    def _init():
        hf_ref[...] = jnp.zeros_like(hf_ref)
        cf_ref[...] = jnp.zeros_like(cf_ref)
        hb_ref[...] = jnp.zeros_like(hb_ref)
        cb_ref[...] = jnp.zeros_like(cb_ref)

    # Hoisted input projection: one (Tc*Bt, I) @ (I, 4H) MXU matmul per
    # direction per chunk (f32 accumulation), biases pre-summed.
    xf = xf_ref[...].reshape(Tc * Bt, I).astype(jnp.float32)
    xb = xb_ref[...].reshape(Tc * Bt, I).astype(jnp.float32)
    gxf_ref[...] = (jnp.dot(xf, wih_f_ref[...], preferred_element_type=jnp.float32)
                    + b_f_ref[...]).reshape(Tc, Bt, G)
    gxb_ref[...] = (jnp.dot(xb, wih_b_ref[...], preferred_element_type=jnp.float32)
                    + b_b_ref[...]).reshape(Tc, Bt, G)

    def gate_act(gates):
        # Full-width nonlinearities: when H < 128 all four gates share vregs,
        # so one sigmoid pass + one tanh pass over (Bt, 4H) replaces four
        # partial-width EUP passes.  At H % 128 == 0 per-gate slices are used.
        if H % 128 == 0:
            i = _sigmoid(gates[:, 0 * H:1 * H])
            f = _sigmoid(gates[:, 1 * H:2 * H])
            g = jnp.tanh(gates[:, 2 * H:3 * H])
            o = _sigmoid(gates[:, 3 * H:4 * H])
        else:
            sg = _sigmoid(gates)
            tg = jnp.tanh(gates)
            i, f, o = sg[:, 0 * H:1 * H], sg[:, 1 * H:2 * H], sg[:, 3 * H:4 * H]
            g = tg[:, 2 * H:3 * H]
        return i, f, g, o

    def step(s, carry):
        h_f, c_f, h_b, c_b = carry
        sb = Tc - 1 - s            # backward direction walks its chunk in reverse

        # The two directions are independent; interleaving them fills the
        # MXU-drain / EUP bubbles of the serial recurrence on single-TC chips.
        gf = gxf_ref[s] + jnp.dot(h_f, whh_f_ref[...],
                                  preferred_element_type=jnp.float32)
        gb = gxb_ref[sb] + jnp.dot(h_b, whh_b_ref[...],
                                   preferred_element_type=jnp.float32)
        i_f, f_f, g_f, o_f = gate_act(gf)
        i_b, f_b, g_b, o_b = gate_act(gb)
        c_f = f_f * c_f + i_f * g_f
        c_b = f_b * c_b + i_b * g_b
        h_f = o_f * jnp.tanh(c_f)
        h_b = o_b * jnp.tanh(c_b)
        of_ref[s] = h_f.astype(of_ref.dtype)
        ob_ref[sb] = h_b.astype(ob_ref.dtype)
        return h_f, c_f, h_b, c_b

    carry0 = (hf_ref[...], cf_ref[...], hb_ref[...], cb_ref[...])
    h_f, c_f, h_b, c_b = jax.lax.fori_loop(0, Tc, step, carry0, unroll=unroll)

    # Carry the recurrent state to the next chunk of this batch tile.
    hf_ref[...] = h_f
    cf_ref[...] = c_f
    hb_ref[...] = h_b
    cb_ref[...] = c_b


def bilstm_forward(x, params, *, time_chunk=None, io_dtype=jnp.float32):
    """x: (B, T, I) float32 -> (B, T, 2*H) float32 (forward ++ backward).

    io_dtype controls the storage dtype of the streamed x / hidden outputs
    (bf16 halves HBM traffic; compute stays f32).  Default f32 keeps
    bit-closeness to the f32 reference.
    """
    B, T, I = x.shape
    H = params["whh"].shape[1]
    G = 4 * H
    io_dtype = jnp.dtype(io_dtype)

    # Batch tiling: Bt rows per tile (multiple of the f32 sublane 8, <=128).
    # The batch-tile axis is the "parallel" grid axis, so on multi-TC chips
    # (v7x) large batches split across cores, each with private state scratch.
    Bt = min(-(-B // 8) * 8, 128)
    n_bt = -(-B // Bt)
    Bp = n_bt * Bt

    # Time chunk: target ~64 steps (review: 32-128), bounded by a VMEM budget
    # and a divisor of T (no time padding — padding would corrupt the backward
    # recurrence, which starts from the end of the sequence).
    if time_chunk is None:
        per_tc = 4 * Bt * (4 * I + 2 * G + 4 * H)   # x blocks + gx scratch + out blocks
        cap = max(1, min(64, (24 << 20) // max(per_tc, 1)))
        cands = [c for c in range(min(T, cap), 0, -1) if T % c == 0]
        time_chunk = cands[0]
        for c in cands:            # prefer >=2 chunks so the x DMA pipeline overlaps
            if T // c >= 2 and 2 * c >= cands[0]:
                time_chunk = c
                break
    Tc = time_chunk
    assert T % Tc == 0, "time_chunk must divide T"
    nch = T // Tc
    unroll = max(u for u in (1, 2, 4, 8) if Tc % u == 0)

    # Time-major, batch-padded input: (T, Bp, I).  Only a transpose + pad —
    # chunking is expressed in the BlockSpecs, no extra reshape round trip.
    x_tm = jnp.transpose(x, (1, 0, 2)).astype(io_dtype)
    if Bp != B:
        x_tm = jnp.pad(x_tm, ((0, 0), (0, Bp - B), (0, 0)))

    wih_f, whh_f, b_f = params["wih"][0], params["whh"][0], params["b"][0]
    wih_b, whh_b, b_b = params["wih"][1], params["whh"][1], params["b"][1]

    # VMEM budget: double-buffered x/out blocks + resident weights + scratch,
    # capped at 3/4 of the chip's physical VMEM (64 MiB/TC on v7x, 128 MiB on
    # v5e/v6e) instead of a fixed 32 MiB.
    blk = (2 * 2 * Tc * Bt * I * io_dtype.itemsize      # x blocks (2 dirs, 2 bufs)
           + 2 * 2 * Tc * Bt * H * io_dtype.itemsize)   # out blocks (2 dirs, 2 bufs)
    wbytes = 4 * 2 * (I * G + H * G + G)                 # resident f32 weights
    scr = 4 * (2 * Tc * Bt * G + 4 * Bt * H)
    try:
        vmem_cap = int(pltpu.get_tpu_info().vmem_capacity_bytes)
    except Exception:
        vmem_cap = 64 << 20
    vmem_limit = int(min(max(blk + wbytes + scr + (8 << 20), 16 << 20),
                         (vmem_cap * 3) // 4))

    flops = 4 * T * Bp * G * (I + H)
    transcendentals = 2 * T * Bp * (2 * G + H)
    bytes_accessed = (2 * T * Bp * I * io_dtype.itemsize
                      + 2 * T * Bp * H * io_dtype.itemsize + wbytes)

    x_blk = (Tc, Bt, I)
    o_blk = (Tc, Bt, H)
    # Weights: whole-array VMEM residency (single copy, no double-buffering).
    w_spec = pl.BlockSpec(memory_space=pltpu.MemorySpace.VMEM)

    out_f, out_b = pl.pallas_call(
        functools.partial(bilstm_kernel, unroll=unroll),
        out_shape=(jax.ShapeDtypeStruct((T, Bp, H), io_dtype),
                   jax.ShapeDtypeStruct((T, Bp, H), io_dtype)),
        grid_spec=pltpu.PrefetchScalarGridSpec(
            num_scalar_prefetch=0,
            grid=(n_bt, nch),
            in_specs=[
                pl.BlockSpec(x_blk, lambda bi, ci: (ci, bi, 0)),            # fwd x chunk
                pl.BlockSpec(x_blk, lambda bi, ci: (nch - 1 - ci, bi, 0)),  # bwd x chunk
                w_spec, w_spec, w_spec,                                     # fwd weights
                w_spec, w_spec, w_spec,                                     # bwd weights
            ],
            out_specs=[
                pl.BlockSpec(o_blk, lambda bi, ci: (ci, bi, 0)),            # fwd hidden
                pl.BlockSpec(o_blk, lambda bi, ci: (nch - 1 - ci, bi, 0)),  # bwd hidden
            ],
            scratch_shapes=[
                pltpu.VMEM((Tc, Bt, G), jnp.float32),   # hoisted fwd x-projection
                pltpu.VMEM((Tc, Bt, G), jnp.float32),   # hoisted bwd x-projection
                pltpu.VMEM((Bt, H), jnp.float32),       # h fwd
                pltpu.VMEM((Bt, H), jnp.float32),       # c fwd
                pltpu.VMEM((Bt, H), jnp.float32),       # h bwd
                pltpu.VMEM((Bt, H), jnp.float32),       # c bwd
            ],
        ),
        compiler_params=pltpu.CompilerParams(
            # Batch-tile axis may split across cores (private scratch per core);
            # the chunk axis MUST stay innermost + sequential for the h/c carry.
            dimension_semantics=("parallel", "arbitrary"),
            vmem_limit_bytes=vmem_limit,
        ),
        cost_estimate=pl.CostEstimate(
            flops=flops,
            transcendentals=transcendentals,
            bytes_accessed=bytes_accessed,
        ),
    )(x_tm, x_tm, wih_f, whh_f, b_f, wih_b, whh_b, b_b)

    # (T, Bp, H) -> (B, T, H); forward lanes first, backward lanes second.
    out_f = jnp.transpose(out_f, (1, 0, 2))[:B]
    out_b = jnp.transpose(out_b, (1, 0, 2))[:B]
    return jnp.concatenate([out_f, out_b], axis=-1).astype(jnp.float32)


def init_bilstm_params(key, input_size, hidden_size):
    """Deterministic init mimicking PyTorch's uniform(-1/sqrt(H), 1/sqrt(H)).

    Returns per-direction weights stacked along a leading direction axis:
      wih: (2, I, 4H), whh: (2, H, 4H), b: (2, 1, 4H)   (gate order i,f,g,o).
    """
    k = 1.0 / jnp.sqrt(jnp.float32(hidden_size))
    keys = jax.random.split(key, 8)

    def u(kk, shape):
        return jax.random.uniform(kk, shape, jnp.float32, minval=-k, maxval=k)

    wih, whh, b = [], [], []
    for off in (0, 4):                       # 0 = forward, 4 = backward
        w_ih = u(keys[off + 0], (4 * hidden_size, input_size))   # PyTorch layout
        w_hh = u(keys[off + 1], (4 * hidden_size, hidden_size))
        b_ih = u(keys[off + 2], (4 * hidden_size,))
        b_hh = u(keys[off + 3], (4 * hidden_size,))
        wih.append(w_ih.T)                           # (I, 4H)
        whh.append(w_hh.T)                           # (H, 4H)
        b.append((b_ih + b_hh)[None, :])             # (1, 4H)
    return {"wih": jnp.stack(wih), "whh": jnp.stack(whh), "b": jnp.stack(b)}


def bilstm_reference(x, params):
    """Pure-JAX reference (lax.scan) with identical PyTorch LSTM semantics."""
    B, T, I = x.shape
    H = params["whh"].shape[1]

    def run_dir(wih, whh, b, reverse):
        def step(carry, x_t):
            h, c = carry
            gates = x_t @ wih + h @ whh + b[0]
            i = jax.nn.sigmoid(gates[:, 0 * H:1 * H])
            f = jax.nn.sigmoid(gates[:, 1 * H:2 * H])
            g = jnp.tanh(gates[:, 2 * H:3 * H])
            o = jax.nn.sigmoid(gates[:, 3 * H:4 * H])
            c = f * c + i * g
            h = o * jnp.tanh(c)
            return (h, c), h

        xs = jnp.transpose(x, (1, 0, 2))
        if reverse:
            xs = xs[::-1]
        h0 = jnp.zeros((B, H), jnp.float32)
        _, hs = jax.lax.scan(step, (h0, h0), xs)
        if reverse:
            hs = hs[::-1]
        return jnp.transpose(hs, (1, 0, 2))

    out_f = run_dir(params["wih"][0], params["whh"][0], params["b"][0], False)
    out_b = run_dir(params["wih"][1], params["whh"][1], params["b"][1], True)
    return jnp.concatenate([out_f, out_b], axis=-1)


if __name__ == "__main__":
    B, T = 2, 8
    hidden_dim = 16        # LSTM input_size
    lstm_hidden_dim = 32   # LSTM hidden_size

    key = jax.random.PRNGKey(0)
    kx, kp = jax.random.split(key)
    x = jax.random.normal(kx, (B, T, hidden_dim), dtype=jnp.float32)
    params = init_bilstm_params(kp, hidden_dim, lstm_hidden_dim)

    out = jax.block_until_ready(bilstm_forward(x, params))
    assert out.shape == (B, T, 2 * lstm_hidden_dim), out.shape

    ref = jax.block_until_ready(bilstm_reference(x, params))
    assert jnp.allclose(out, ref, atol=1e-4, rtol=1e-4), (
        float(jnp.max(jnp.abs(out - ref))))

    print("KERNEL_OK")
</pallas_src>

<mosaic_0001>
module attributes {stable_mosaic.version = 11 : i64} {
  func.func @bilstm_kernel(%arg0: i32, %arg1: i32, %arg2: memref<4x8x16xf32, #tpu.memory_space<vmem>>, %arg3: memref<4x8x16xf32, #tpu.memory_space<vmem>>, %arg4: memref<16x128xf32, #tpu.memory_space<vmem>>, %arg5: memref<32x128xf32, #tpu.memory_space<vmem>>, %arg6: memref<1x128xf32, #tpu.memory_space<vmem>>, %arg7: memref<16x128xf32, #tpu.memory_space<vmem>>, %arg8: memref<32x128xf32, #tpu.memory_space<vmem>>, %arg9: memref<1x128xf32, #tpu.memory_space<vmem>>, %arg10: memref<4x8x32xf32, #tpu.memory_space<vmem>>, %arg11: memref<4x8x32xf32, #tpu.memory_space<vmem>>, %arg12: memref<4x8x128xf32, #tpu.memory_space<vmem>>, %arg13: memref<4x8x128xf32, #tpu.memory_space<vmem>>, %arg14: memref<8x32xf32, #tpu.memory_space<vmem>>, %arg15: memref<8x32xf32, #tpu.memory_space<vmem>>, %arg16: memref<8x32xf32, #tpu.memory_space<vmem>>, %arg17: memref<8x32xf32, #tpu.memory_space<vmem>>) attributes {dimension_semantics = [#tpu.dimension_semantics<parallel>, #tpu.dimension_semantics<arbitrary>], iteration_bounds = array<i64: 1, 2>, scalar_prefetch = 0 : i64, scratch_operands = 6 : i64, tpu.core_type = #tpu.core_type<tc>, window_params = [{transform_indices = @transform_0, window_bounds = array<i64: 4, 8, 16>}, {transform_indices = @transform_1, window_bounds = array<i64: 4, 8, 16>}, {pipeline_mode = #tpu.pipeline_mode<synchronous>, transform_indices = @transform_2, window_bounds = array<i64: 16, 128>}, {pipeline_mode = #tpu.pipeline_mode<synchronous>, transform_indices = @transform_3, window_bounds = array<i64: 32, 128>}, {pipeline_mode = #tpu.pipeline_mode<synchronous>, transform_indices = @transform_4, window_bounds = array<i64: 1, 128>}, {pipeline_mode = #tpu.pipeline_mode<synchronous>, transform_indices = @transform_5, window_bounds = array<i64: 16, 128>}, {pipeline_mode = #tpu.pipeline_mode<synchronous>, transform_indices = @transform_6, window_bounds = array<i64: 32, 128>}, {pipeline_mode = #tpu.pipeline_mode<synchronous>, transform_indices = @transform_7, window_bounds = array<i64: 1, 128>}, {transform_indices = @transform_8, window_bounds = array<i64: 4, 8, 32>}, {transform_indices = @transform_9, window_bounds = array<i64: 4, 8, 32>}]} {
    %c0_i32 = arith.constant 0 : i32
    %0 = arith.cmpi eq, %arg1, %c0_i32 : i32
    %1 = arith.extui %0 : i1 to i32
    %c0_i32_0 = arith.constant 0 : i32
    %2 = arith.cmpi ne, %1, %c0_i32_0 : i32
    scf.if %2 {
      %cst_122 = arith.constant 0.000000e+00 : f32
      %249 = vector.broadcast %cst_122 : f32 to vector<8x32xf32>
      %c0_123 = arith.constant 0 : index
      %c0_124 = arith.constant 0 : index
      %250 = vector.load %arg14[%c0_123, %c0_124] : memref<8x32xf32, #tpu.memory_space<vmem>>, vector<8x32xf32>
      tpu.vector_store %arg14[%c0_123, %c0_124], %249 {strides = array<i32>} : memref<8x32xf32, #tpu.memory_space<vmem>>, vector<8x32xf32>,
      %cst_125 = arith.constant 0.000000e+00 : f32
      %251 = vector.broadcast %cst_125 : f32 to vector<8x32xf32>
      %c0_126 = arith.constant 0 : index
      %c0_127 = arith.constant 0 : index
      %252 = vector.load %arg15[%c0_126, %c0_127] : memref<8x32xf32, #tpu.memory_space<vmem>>, vector<8x32xf32>
      tpu.vector_store %arg15[%c0_126, %c0_127], %251 {strides = array<i32>} : memref<8x32xf32, #tpu.memory_space<vmem>>, vector<8x32xf32>,
      %cst_128 = arith.constant 0.000000e+00 : f32
      %253 = vector.broadcast %cst_128 : f32 to vector<8x32xf32>
      %c0_129 = arith.constant 0 : index
      %c0_130 = arith.constant 0 : index
      %254 = vector.load %arg16[%c0_129, %c0_130] : memref<8x32xf32, #tpu.memory_space<vmem>>, vector<8x32xf32>
      tpu.vector_store %arg16[%c0_129, %c0_130], %253 {strides = array<i32>} : memref<8x32xf32, #tpu.memory_space<vmem>>, vector<8x32xf32>,
      %cst_131 = arith.constant 0.000000e+00 : f32
      %255 = vector.broadcast %cst_131 : f32 to vector<8x32xf32>
      %c0_132 = arith.constant 0 : index
      %c0_133 = arith.constant 0 : index
      %256 = vector.load %arg17[%c0_132, %c0_133] : memref<8x32xf32, #tpu.memory_space<vmem>>, vector<8x32xf32>
      tpu.vector_store %arg17[%c0_132, %c0_133], %255 {strides = array<i32>} : memref<8x32xf32, #tpu.memory_space<vmem>>, vector<8x32xf32>,
    } else {
    }
    %c0 = arith.constant 0 : index
    %c0_1 = arith.constant 0 : index
    %c0_2 = arith.constant 0 : index
    %3 = vector.load %arg2[%c0, %c0_1, %c0_2] : memref<4x8x16xf32, #tpu.memory_space<vmem>>, vector<4x8x16xf32>
    %4 = vector.shape_cast %3 : vector<4x8x16xf32> to vector<32x16xf32>
    %c0_3 = arith.constant 0 : index
    %c0_4 = arith.constant 0 : index
    %c0_5 = arith.constant 0 : index
    %5 = vector.load %arg3[%c0_3, %c0_4, %c0_5] : memref<4x8x16xf32, #tpu.memory_space<vmem>>, vector<4x8x16xf32>
    %6 = vector.shape_cast %5 : vector<4x8x16xf32> to vector<32x16xf32>
    %c0_6 = arith.constant 0 : index
    %c0_7 = arith.constant 0 : index
    %7 = vector.load %arg4[%c0_6, %c0_7] : memref<16x128xf32, #tpu.memory_space<vmem>>, vector<16x128xf32>
    %cst = arith.constant dense<0.000000e+00> : vector<32x128xf32>
    %8 = tpu.matmul %4, %7, %cst {dimension_numbers = #tpu.dot_dimension_numbers<[1], [0], [0], [1], [0, 0, 1, 1], [], []>} : vector<32x16xf32>, vector<16x128xf32>, vector<32x128xf32> -> vector<32x128xf32>
    %c0_8 = arith.constant 0 : index
    %c0_9 = arith.constant 0 : index
    %9 = vector.load %arg6[%c0_8, %c0_9] : memref<1x128xf32, #tpu.memory_space<vmem>>, vector<1x128xf32>
    %10 = vector.broadcast %9 : vector<1x128xf32> to vector<32x128xf32>
    %11 = arith.addf %8, %10 : vector<32x128xf32>
    %12 = vector.shape_cast %11 : vector<32x128xf32> to vector<4x8x128xf32>
    %c0_10 = arith.constant 0 : index
    %c0_11 = arith.constant 0 : index
    %c0_12 = arith.constant 0 : index
    %13 = vector.load %arg12[%c0_10, %c0_11, %c0_12] : memref<4x8x128xf32, #tpu.memory_space<vmem>>, vector<4x8x128xf32>
    tpu.vector_store %arg12[%c0_10, %c0_11, %c0_12], %12 {strides = array<i32>} : memref<4x8x128xf32, #tpu.memory_space<vmem>>, vector<4x8x128xf32>,
    %c0_13 = arith.constant 0 : index
    %c0_14 = arith.constant 0 : index
    %14 = vector.load %arg7[%c0_13, %c0_14] : memref<16x128xf32, #tpu.memory_space<vmem>>, vector<16x128xf32>
    %cst_15 = arith.constant dense<0.000000e+00> : vector<32x128xf32>
    %15 = tpu.matmul %6, %14, %cst_15 {dimension_numbers = #tpu.dot_dimension_numbers<[1], [0], [0], [1], [0, 0, 1, 1], [], []>} : vector<32x16xf32>, vector<16x128xf32>, vector<32x128xf32> -> vector<32x128xf32>
    %c0_16 = arith.constant 0 : index
    %c0_17 = arith.constant 0 : index
    %16 = vector.load %arg9[%c0_16, %c0_17] : memref<1x128xf32, #tpu.memory_space<vmem>>, vector<1x128xf32>
    %17 = vector.broadcast %16 : vector<1x128xf32> to vector<32x128xf32>
    %18 = arith.addf %15, %17 : vector<32x128xf32>
    %19 = vector.shape_cast %18 : vector<32x128xf32> to vector<4x8x128xf32>
    %c0_18 = arith.constant 0 : index
    %c0_19 = arith.constant 0 : index
    %c0_20 = arith.constant 0 : index
    %20 = vector.load %arg13[%c0_18, %c0_19, %c0_20] : memref<4x8x128xf32, #tpu.memory_space<vmem>>, vector<4x8x128xf32>
    tpu.vector_store %arg13[%c0_18, %c0_19, %c0_20], %19 {strides = array<i32>} : memref<4x8x128xf32, #tpu.memory_space<vmem>>, vector<4x8x128xf32>,
    %c0_21 = arith.constant 0 : index
    %c0_22 = arith.constant 0 : index
    %21 = vector.load %arg14[%c0_21, %c0_22] : memref<8x32xf32, #tpu.memory_space<vmem>>, vector<8x32xf32>
    %c0_23 = arith.constant 0 : index
    %c0_24 = arith.constant 0 : index
    %22 = vector.load %arg15[%c0_23, %c0_24] : memref<8x32xf32, #tpu.memory_space<vmem>>, vector<8x32xf32>
    %c0_25 = arith.constant 0 : index
    %c0_26 = arith.constant 0 : index
    %23 = vector.load %arg16[%c0_25, %c0_26] : memref<8x32xf32, #tpu.memory_space<vmem>>, vector<8x32xf32>
    %c0_27 = arith.constant 0 : index
    %c0_28 = arith.constant 0 : index
    %24 = vector.load %arg17[%c0_27, %c0_28] : memref<8x32xf32, #tpu.memory_space<vmem>>, vector<8x32xf32>
    %c0_i32_29 = arith.constant 0 : i32
    %c3_i32 = arith.constant 3 : i32
    %25 = arith.subi %c3_i32, %c0_i32_29 : i32
    %26 = arith.index_cast %c0_i32_29 : i32 to index
    %c0_30 = arith.constant 0 : index
    %c0_31 = arith.constant 0 : index
    %27 = vector.load %arg12[%26, %c0_30, %c0_31] : memref<4x8x128xf32, #tpu.memory_space<vmem>>, vector<1x8x128xf32>
    %28 = vector.shape_cast %27 : vector<1x8x128xf32> to vector<8x128xf32>
    %c0_32 = arith.constant 0 : index
    %c0_33 = arith.constant 0 : index
    %29 = vector.load %arg5[%c0_32, %c0_33] : memref<32x128xf32, #tpu.memory_space<vmem>>, vector<32x128xf32>
    %cst_34 = arith.constant dense<0.000000e+00> : vector<8x128xf32>
    %30 = tpu.matmul %21, %29, %cst_34 {dimension_numbers = #tpu.dot_dimension_numbers<[1], [0], [0], [1], [0, 0, 1, 1], [], []>} : vector<8x32xf32>, vector<32x128xf32>, vector<8x128xf32> -> vector<8x128xf32>
    %31 = arith.addf %28, %30 : vector<8x128xf32>
    %32 = arith.index_cast %25 : i32 to index
    %c0_35 = arith.constant 0 : index
    %c0_36 = arith.constant 0 : index
    %33 = vector.load %arg13[%32, %c0_35, %c0_36] : memref<4x8x128xf32, #tpu.memory_space<vmem>>, vector<1x8x128xf32>
    %34 = vector.shape_cast %33 : vector<1x8x128xf32> to vector<8x128xf32>
    %c0_37 = arith.constant 0 : index
    %c0_38 = arith.constant 0 : index
    %35 = vector.load %arg8[%c0_37, %c0_38] : memref<32x128xf32, #tpu.memory_space<vmem>>, vector<32x128xf32>
    %cst_39 = arith.constant dense<0.000000e+00> : vector<8x128xf32>
    %36 = tpu.matmul %23, %35, %cst_39 {dimension_numbers = #tpu.dot_dimension_numbers<[1], [0], [0], [1], [0, 0, 1, 1], [], []>} : vector<8x32xf32>, vector<32x128xf32>, vector<8x128xf32> -> vector<8x128xf32>
    %37 = arith.addf %34, %36 : vector<8x128xf32>
    %cst_40 = arith.constant 5.000000e-01 : f32
    %38 = vector.broadcast %cst_40 : f32 to vector<8x128xf32>
    %39 = arith.mulf %38, %31 : vector<8x128xf32>
    %40 = math.tanh %39 : vector<8x128xf32>
    %cst_41 = arith.constant 1.000000e+00 : f32
    %41 = vector.broadcast %cst_41 : f32 to vector<8x128xf32>
    %42 = arith.addf %40, %41 : vector<8x128xf32>
    %cst_42 = arith.constant 5.000000e-01 : f32
    %43 = vector.broadcast %cst_42 : f32 to vector<8x128xf32>
    %44 = arith.mulf %43, %42 : vector<8x128xf32>
    %45 = math.tanh %31 : vector<8x128xf32>
    %46 = vector.extract_strided_slice %44 {offsets = [0, 0], sizes = [8, 32], strides = [1, 1]} : vector<8x128xf32> to vector<8x32xf32>
    %47 = vector.extract_strided_slice %44 {offsets = [0, 32], sizes = [8, 32], strides = [1, 1]} : vector<8x128xf32> to vector<8x32xf32>
    %48 = vector.extract_strided_slice %44 {offsets = [0, 96], sizes = [8, 32], strides = [1, 1]} : vector<8x128xf32> to vector<8x32xf32>
    %49 = vector.extract_strided_slice %45 {offsets = [0, 64], sizes = [8, 32], strides = [1, 1]} : vector<8x128xf32> to vector<8x32xf32>
    %cst_43 = arith.constant 5.000000e-01 : f32
    %50 = vector.broadcast %cst_43 : f32 to vector<8x128xf32>
    %51 = arith.mulf %50, %37 : vector<8x128xf32>
    %52 = math.tanh %51 : vector<8x128xf32>
    %cst_44 = arith.constant 1.000000e+00 : f32
    %53 = vector.broadcast %cst_44 : f32 to vector<8x128xf32>
    %54 = arith.addf %52, %53 : vector<8x128xf32>
    %cst_45 = arith.constant 5.000000e-01 : f32
    %55 = vector.broadcast %cst_45 : f32 to vector<8x128xf32>
    %56 = arith.mulf %55, %54 : vector<8x128xf32>
    %57 = math.tanh %37 : vector<8x128xf32>
    %58 = vector.extract_strided_slice %56 {offsets = [0, 0], sizes = [8, 32], strides = [1, 1]} : vector<8x128xf32> to vector<8x32xf32>
    %59 = vector.extract_strided_slice %56 {offsets = [0, 32], sizes = [8, 32], strides = [1, 1]} : vector<8x128xf32> to vector<8x32xf32>
    %60 = vector.extract_strided_slice %56 {offsets = [0, 96], sizes = [8, 32], strides = [1, 1]} : vector<8x128xf32> to vector<8x32xf32>
    %61 = vector.extract_strided_slice %57 {offsets = [0, 64], sizes = [8, 32], strides = [1, 1]} : vector<8x128xf32> to vector<8x32xf32>
    %62 = arith.mulf %47, %22 : vector<8x32xf32>
    %63 = arith.mulf %46, %49 : vector<8x32xf32>
    %64 = arith.addf %62, %63 : vector<8x32xf32>
    %65 = arith.mulf %59, %24 : vector<8x32xf32>
    %66 = arith.mulf %58, %61 : vector<8x32xf32>
    %67 = arith.addf %65, %66 : vector<8x32xf32>
    %68 = math.tanh %64 : vector<8x32xf32>
    %69 = arith.mulf %48, %68 : vector<8x32xf32>
    %70 = math.tanh %67 : vector<8x32xf32>
    %71 = arith.mulf %60, %70 : vector<8x32xf32>
    %72 = arith.index_cast %c0_i32_29 : i32 to index
    %c0_46 = arith.constant 0 : index
    %c0_47 = arith.constant 0 : index
    %73 = vector.load %arg10[%72, %c0_46, %c0_47] : memref<4x8x32xf32, #tpu.memory_space<vmem>>, vector<1x8x32xf32>
    %74 = vector.shape_cast %73 : vector<1x8x32xf32> to vector<8x32xf32>
    %75 = vector.shape_cast %69 : vector<8x32xf32> to vector<1x8x32xf32>
    tpu.vector_store %arg10[%72, %c0_46, %c0_47], %75 {strides = array<i32>} : memref<4x8x32xf32, #tpu.memory_space<vmem>>, vector<1x8x32xf32>,
    %76 = arith.index_cast %25 : i32 to index
    %c0_48 = arith.constant 0 : index
    %c0_49 = arith.constant 0 : index
    %77 = vector.load %arg11[%76, %c0_48, %c0_49] : memref<4x8x32xf32, #tpu.memory_space<vmem>>, vector<1x8x32xf32>
    %78 = vector.shape_cast %77 : vector<1x8x32xf32> to vector<8x32xf32>
    %79 = vector.shape_cast %71 : vector<8x32xf32> to vector<1x8x32xf32>
    tpu.vector_store %arg11[%76, %c0_48, %c0_49], %79 {strides = array<i32>} : memref<4x8x32xf32, #tpu.memory_space<vmem>>, vector<1x8x32xf32>,
    %c1_i32 = arith.constant 1 : i32
    %c3_i32_50 = arith.constant 3 : i32
    %80 = arith.subi %c3_i32_50, %c1_i32 : i32
    %81 = arith.index_cast %c1_i32 : i32 to index
    %c0_51 = arith.constant 0 : index
    %c0_52 = arith.constant 0 : index
    %82 = vector.load %arg12[%81, %c0_51, %c0_52] : memref<4x8x128xf32, #tpu.memory_space<vmem>>, vector<1x8x128xf32>
    %83 = vector.shape_cast %82 : vector<1x8x128xf32> to vector<8x128xf32>
    %c0_53 = arith.constant 0 : index
    %c0_54 = arith.constant 0 : index
    %84 = vector.load %arg5[%c0_53, %c0_54] : memref<32x128xf32, #tpu.memory_space<vmem>>, vector<32x128xf32>
    %cst_55 = arith.constant dense<0.000000e+00> : vector<8x128xf32>
    %85 = tpu.matmul %69, %84, %cst_55 {dimension_numbers = #tpu.dot_dimension_numbers<[1], [0], [0], [1], [0, 0, 1, 1], [], []>} : vector<8x32xf32>, vector<32x128xf32>, vector<8x128xf32> -> vector<8x128xf32>
    %86 = arith.addf %83, %85 : vector<8x128xf32>
    %87 = arith.index_cast %80 : i32 to index
    %c0_56 = arith.constant 0 : index
    %c0_57 = arith.constant 0 : index
    %88 = vector.load %arg13[%87, %c0_56, %c0_57] : memref<4x8x128xf32, #tpu.memory_space<vmem>>, vector<1x8x128xf32>
    %89 = vector.shape_cast %88 : vector<1x8x128xf32> to vector<8x128xf32>
    %c0_58 = arith.constant 0 : index
    %c0_59 = arith.constant 0 : index
    %90 = vector.load %arg8[%c0_58, %c0_59] : memref<32x128xf32, #tpu.memory_space<vmem>>, vector<32x128xf32>
    %cst_60 = arith.constant dense<0.000000e+00> : vector<8x128xf32>
    %91 = tpu.matmul %71, %90, %cst_60 {dimension_numbers = #tpu.dot_dimension_numbers<[1], [0], [0], [1], [0, 0, 1, 1], [], []>} : vector<8x32xf32>, vector<32x128xf32>, vector<8x128xf32> -> vector<8x128xf32>
    %92 = arith.addf %89, %91 : vector<8x128xf32>
    %cst_61 = arith.constant 5.000000e-01 : f32
    %93 = vector.broadcast %cst_61 : f32 to vector<8x128xf32>
    %94 = arith.mulf %93, %86 : vector<8x128xf32>
    %95 = math.tanh %94 : vector<8x128xf32>
    %cst_62 = arith.constant 1.000000e+00 : f32
    %96 = vector.broadcast %cst_62 : f32 to vector<8x128xf32>
    %97 = arith.addf %95, %96 : vector<8x128xf32>
    %cst_63 = arith.constant 5.000000e-01 : f32
    %98 = vector.broadcast %cst_63 : f32 to vector<8x128xf32>
    %99 = arith.mulf %98, %97 : vector<8x128xf32>
    %100 = math.tanh %86 : vector<8x128xf32>
    %101 = vector.extract_strided_slice %99 {offsets = [0, 0], sizes = [8, 32], strides = [1, 1]} : vector<8x128xf32> to vector<8x32xf32>
    %102 = vector.extract_strided_slice %99 {offsets = [0, 32], sizes = [8, 32], strides = [1, 1]} : vector<8x128xf32> to vector<8x32xf32>
    %103 = vector.extract_strided_slice %99 {offsets = [0, 96], sizes = [8, 32], strides = [1, 1]} : vector<8x128xf32> to vector<8x32xf32>
    %104 = vector.extract_strided_slice %100 {offsets = [0, 64], sizes = [8, 32], strides = [1, 1]} : vector<8x128xf32> to vector<8x32xf32>
    %cst_64 = arith.constant 5.000000e-01 : f32
    %105 = vector.broadcast %cst_64 : f32 to vector<8x128xf32>
    %106 = arith.mulf %105, %92 : vector<8x128xf32>
    %107 = math.tanh %106 : vector<8x128xf32>
    %cst_65 = arith.constant 1.000000e+00 : f32
    %108 = vector.broadcast %cst_65 : f32 to vector<8x128xf32>
    %109 = arith.addf %107, %108 : vector<8x128xf32>
    %cst_66 = arith.constant 5.000000e-01 : f32
    %110 = vector.broadcast %cst_66 : f32 to vector<8x128xf32>
    %111 = arith.mulf %110, %109 : vector<8x128xf32>
    %112 = math.tanh %92 : vector<8x128xf32>
    %113 = vector.extract_strided_slice %111 {offsets = [0, 0], sizes = [8, 32], strides = [1, 1]} : vector<8x128xf32> to vector<8x32xf32>
    %114 = vector.extract_strided_slice %111 {offsets = [0, 32], sizes = [8, 32], strides = [1, 1]} : vector<8x128xf32> to vector<8x32xf32>
    %115 = vector.extract_strided_slice %111 {offsets = [0, 96], sizes = [8, 32], strides = [1, 1]} : vector<8x128xf32> to vector<8x32xf32>
    %116 = vector.extract_strided_slice %112 {offsets = [0, 64], sizes = [8, 32], strides = [1, 1]} : vector<8x128xf32> to vector<8x32xf32>
    %117 = arith.mulf %102, %64 : vector<8x32xf32>
    %118 = arith.mulf %101, %104 : vector<8x32xf32>
    %119 = arith.addf %117, %118 : vector<8x32xf32>
    %120 = arith.mulf %114, %67 : vector<8x32xf32>
    %121 = arith.mulf %113, %116 : vector<8x32xf32>
    %122 = arith.addf %120, %121 : vector<8x32xf32>
    %123 = math.tanh %119 : vector<8x32xf32>
    %124 = arith.mulf %103, %123 : vector<8x32xf32>
    %125 = math.tanh %122 : vector<8x32xf32>
    %126 = arith.mulf %115, %125 : vector<8x32xf32>
    %127 = arith.index_cast %c1_i32 : i32 to index
    %c0_67 = arith.constant 0 : index
    %c0_68 = arith.constant 0 : index
    %128 = vector.load %arg10[%127, %c0_67, %c0_68] : memref<4x8x32xf32, #tpu.memory_space<vmem>>, vector<1x8x32xf32>
    %129 = vector.shape_cast %128 : vector<1x8x32xf32> to vector<8x32xf32>
    %130 = vector.shape_cast %124 : vector<8x32xf32> to vector<1x8x32xf32>
    tpu.vector_store %arg10[%127, %c0_67, %c0_68], %130 {strides = array<i32>} : memref<4x8x32xf32, #tpu.memory_space<vmem>>, vector<1x8x32xf32>,
    %131 = arith.index_cast %80 : i32 to index
    %c0_69 = arith.constant 0 : index
    %c0_70 = arith.constant 0 : index
    %132 = vector.load %arg11[%131, %c0_69, %c0_70] : memref<4x8x32xf32, #tpu.memory_space<vmem>>, vector<1x8x32xf32>
    %133 = vector.shape_cast %132 : vector<1x8x32xf32> to vector<8x32xf32>
    %134 = vector.shape_cast %126 : vector<8x32xf32> to vector<1x8x32xf32>
    tpu.vector_store %arg11[%131, %c0_69, %c0_70], %134 {strides = array<i32>} : memref<4x8x32xf32, #tpu.memory_space<vmem>>, vector<1x8x32xf32>,
    %c2_i32 = arith.constant 2 : i32
    %c3_i32_71 = arith.constant 3 : i32
    %135 = arith.subi %c3_i32_71, %c2_i32 : i32
    %136 = arith.index_cast %c2_i32 : i32 to index
    %c0_72 = arith.constant 0 : index
    %c0_73 = arith.constant 0 : index
    %137 = vector.load %arg12[%136, %c0_72, %c0_73] : memref<4x8x128xf32, #tpu.memory_space<vmem>>, vector<1x8x128xf32>
    %138 = vector.shape_cast %137 : vector<1x8x128xf32> to vector<8x128xf32>
    %c0_74 = arith.constant 0 : index
    %c0_75 = arith.constant 0 : index
    %139 = vector.load %arg5[%c0_74, %c0_75] : memref<32x128xf32, #tpu.memory_space<vmem>>, vector<32x128xf32>
    %cst_76 = arith.constant dense<0.000000e+00> : vector<8x128xf32>
    %140 = tpu.matmul %124, %139, %cst_76 {dimension_numbers = #tpu.dot_dimension_numbers<[1], [0], [0], [1], [0, 0, 1, 1], [], []>} : vector<8x32xf32>, vector<32x128xf32>, vector<8x128xf32> -> vector<8x128xf32>
    %141 = arith.addf %138, %140 : vector<8x128xf32>
    %142 = arith.index_cast %135 : i32 to index
    %c0_77 = arith.constant 0 : index
    %c0_78 = arith.constant 0 : index
    %143 = vector.load %arg13[%142, %c0_77, %c0_78] : memref<4x8x128xf32, #tpu.memory_space<vmem>>, vector<1x8x128xf32>
    %144 = vector.shape_cast %143 : vector<1x8x128xf32> to vector<8x128xf32>
    %c0_79 = arith.constant 0 : index
    %c0_80 = arith.constant 0 : index
    %145 = vector.load %arg8[%c0_79, %c0_80] : memref<32x128xf32, #tpu.memory_space<vmem>>, vector<32x128xf32>
    %cst_81 = arith.constant dense<0.000000e+00> : vector<8x128xf32>
    %146 = tpu.matmul %126, %145, %cst_81 {dimension_numbers = #tpu.dot_dimension_numbers<[1], [0], [0], [1], [0, 0, 1, 1], [], []>} : vector<8x32xf32>, vector<32x128xf32>, vector<8x128xf32> -> vector<8x128xf32>
    %147 = arith.addf %144, %146 : vector<8x128xf32>
    %cst_82 = arith.constant 5.000000e-01 : f32
    %148 = vector.broadcast %cst_82 : f32 to vector<8x128xf32>
    %149 = arith.mulf %148, %141 : vector<8x128xf32>
    %150 = math.tanh %149 : vector<8x128xf32>
    %cst_83 = arith.constant 1.000000e+00 : f32
    %151 = vector.broadcast %cst_83 : f32 to vector<8x128xf32>
    %152 = arith.addf %150, %151 : vector<8x128xf32>
    %cst_84 = arith.constant 5.000000e-01 : f32
    %153 = vector.broadcast %cst_84 : f32 to vector<8x128xf32>
    %154 = arith.mulf %153, %152 : vector<8x128xf32>
    %155 = math.tanh %141 : vector<8x128xf32>
    %156 = vector.extract_strided_slice %154 {offsets = [0, 0], sizes = [8, 32], strides = [1, 1]} : vector<8x128xf32> to vector<8x32xf32>
    %157 = vector.extract_strided_slice %154 {offsets = [0, 32], sizes = [8, 32], strides = [1, 1]} : vector<8x128xf32> to vector<8x32xf32>
    %158 = vector.extract_strided_slice %154 {offsets = [0, 96], sizes = [8, 32], strides = [1, 1]} : vector<8x128xf32> to vector<8x32xf32>
    %159 = vector.extract_strided_slice %155 {offsets = [0, 64], sizes = [8, 32], strides = [1, 1]} : vector<8x128xf32> to vector<8x32xf32>
    %cst_85 = arith.constant 5.000000e-01 : f32
    %160 = vector.broadcast %cst_85 : f32 to vector<8x128xf32>
    %161 = arith.mulf %160, %147 : vector<8x128xf32>
    %162 = math.tanh %161 : vector<8x128xf32>
    %cst_86 = arith.constant 1.000000e+00 : f32
    %163 = vector.broadcast %cst_86 : f32 to vector<8x128xf32>
    %164 = arith.addf %162, %163 : vector<8x128xf32>
    %cst_87 = arith.constant 5.000000e-01 : f32
    %165 = vector.broadcast %cst_87 : f32 to vector<8x128xf32>
    %166 = arith.mulf %165, %164 : vector<8x128xf32>
    %167 = math.tanh %147 : vector<8x128xf32>
    %168 = vector.extract_strided_slice %166 {offsets = [0, 0], sizes = [8, 32], strides = [1, 1]} : vector<8x128xf32> to vector<8x32xf32>
    %169 = vector.extract_strided_slice %166 {offsets = [0, 32], sizes = [8, 32], strides = [1, 1]} : vector<8x128xf32> to vector<8x32xf32>
    %170 = vector.extract_strided_slice %166 {offsets = [0, 96], sizes = [8, 32], strides = [1, 1]} : vector<8x128xf32> to vector<8x32xf32>
    %171 = vector.extract_strided_slice %167 {offsets = [0, 64], sizes = [8, 32], strides = [1, 1]} : vector<8x128xf32> to vector<8x32xf32>
    %172 = arith.mulf %157, %119 : vector<8x32xf32>
    %173 = arith.mulf %156, %159 : vector<8x32xf32>
    %174 = arith.addf %172, %173 : vector<8x32xf32>
    %175 = arith.mulf %169, %122 : vector<8x32xf32>
    %176 = arith.mulf %168, %171 : vector<8x32xf32>
    %177 = arith.addf %175, %176 : vector<8x32xf32>
    %178 = math.tanh %174 : vector<8x32xf32>
    %179 = arith.mulf %158, %178 : vector<8x32xf32>
    %180 = math.tanh %177 : vector<8x32xf32>
    %181 = arith.mulf %170, %180 : vector<8x32xf32>
    %182 = arith.index_cast %c2_i32 : i32 to index
    %c0_88 = arith.constant 0 : index
    %c0_89 = arith.constant 0 : index
    %183 = vector.load %arg10[%182, %c0_88, %c0_89] : memref<4x8x32xf32, #tpu.memory_space<vmem>>, vector<1x8x32xf32>
    %184 = vector.shape_cast %183 : vector<1x8x32xf32> to vector<8x32xf32>
    %185 = vector.shape_cast %179 : vector<8x32xf32> to vector<1x8x32xf32>
    tpu.vector_store %arg10[%182, %c0_88, %c0_89], %185 {strides = array<i32>} : memref<4x8x32xf32, #tpu.memory_space<vmem>>, vector<1x8x32xf32>,
    %186 = arith.index_cast %135 : i32 to index
    %c0_90 = arith.constant 0 : index
    %c0_91 = arith.constant 0 : index
    %187 = vector.load %arg11[%186, %c0_90, %c0_91] : memref<4x8x32xf32, #tpu.memory_space<vmem>>, vector<1x8x32xf32>
    %188 = vector.shape_cast %187 : vector<1x8x32xf32> to vector<8x32xf32>
    %189 = vector.shape_cast %181 : vector<8x32xf32> to vector<1x8x32xf32>
    tpu.vector_store %arg11[%186, %c0_90, %c0_91], %189 {strides = array<i32>} : memref<4x8x32xf32, #tpu.memory_space<vmem>>, vector<1x8x32xf32>,
    %c3_i32_92 = arith.constant 3 : i32
    %c3_i32_93 = arith.constant 3 : i32
    %190 = arith.subi %c3_i32_93, %c3_i32_92 : i32
    %191 = arith.index_cast %c3_i32_92 : i32 to index
    %c0_94 = arith.constant 0 : index
    %c0_95 = arith.constant 0 : index
    %192 = vector.load %arg12[%191, %c0_94, %c0_95] : memref<4x8x128xf32, #tpu.memory_space<vmem>>, vector<1x8x128xf32>
    %193 = vector.shape_cast %192 : vector<1x8x128xf32> to vector<8x128xf32>
    %c0_96 = arith.constant 0 : index
    %c0_97 = arith.constant 0 : index
    %194 = vector.load %arg5[%c0_96, %c0_97] : memref<32x128xf32, #tpu.memory_space<vmem>>, vector<32x128xf32>
    %cst_98 = arith.constant dense<0.000000e+00> : vector<8x128xf32>
    %195 = tpu.matmul %179, %194, %cst_98 {dimension_numbers = #tpu.dot_dimension_numbers<[1], [0], [0], [1], [0, 0, 1, 1], [], []>} : vector<8x32xf32>, vector<32x128xf32>, vector<8x128xf32> -> vector<8x128xf32>
    %196 = arith.addf %193, %195 : vector<8x128xf32>
    %197 = arith.index_cast %190 : i32 to index
    %c0_99 = arith.constant 0 : index
    %c0_100 = arith.constant 0 : index
    %198 = vector.load %arg13[%197, %c0_99, %c0_100] : memref<4x8x128xf32, #tpu.memory_space<vmem>>, vector<1x8x128xf32>
    %199 = vector.shape_cast %198 : vector<1x8x128xf32> to vector<8x128xf32>
    %c0_101 = arith.constant 0 : index
    %c0_102 = arith.constant 0 : index
    %200 = vector.load %arg8[%c0_101, %c0_102] : memref<32x128xf32, #tpu.memory_space<vmem>>, vector<32x128xf32>
    %cst_103 = arith.constant dense<0.000000e+00> : vector<8x128xf32>
    %201 = tpu.matmul %181, %200, %cst_103 {dimension_numbers = #tpu.dot_dimension_numbers<[1], [0], [0], [1], [0, 0, 1, 1], [], []>} : vector<8x32xf32>, vector<32x128xf32>, vector<8x128xf32> -> vector<8x128xf32>
    %202 = arith.addf %199, %201 : vector<8x128xf32>
    %cst_104 = arith.constant 5.000000e-01 : f32
    %203 = vector.broadcast %cst_104 : f32 to vector<8x128xf32>
    %204 = arith.mulf %203, %196 : vector<8x128xf32>
    %205 = math.tanh %204 : vector<8x128xf32>
    %cst_105 = arith.constant 1.000000e+00 : f32
    %206 = vector.broadcast %cst_105 : f32 to vector<8x128xf32>
    %207 = arith.addf %205, %206 : vector<8x128xf32>
    %cst_106 = arith.constant 5.000000e-01 : f32
    %208 = vector.broadcast %cst_106 : f32 to vector<8x128xf32>
    %209 = arith.mulf %208, %207 : vector<8x128xf32>
    %210 = math.tanh %196 : vector<8x128xf32>
    %211 = vector.extract_strided_slice %209 {offsets = [0, 0], sizes = [8, 32], strides = [1, 1]} : vector<8x128xf32> to vector<8x32xf32>
    %212 = vector.extract_strided_slice %209 {offsets = [0, 32], sizes = [8, 32], strides = [1, 1]} : vector<8x128xf32> to vector<8x32xf32>
    %213 = vector.extract_strided_slice %209 {offsets = [0, 96], sizes = [8, 32], strides = [1, 1]} : vector<8x128xf32> to vector<8x32xf32>
    %214 = vector.extract_strided_slice %210 {offsets = [0, 64], sizes = [8, 32], strides = [1, 1]} : vector<8x128xf32> to vector<8x32xf32>
    %cst_107 = arith.constant 5.000000e-01 : f32
    %215 = vector.broadcast %cst_107 : f32 to vector<8x128xf32>
    %216 = arith.mulf %215, %202 : vector<8x128xf32>
    %217 = math.tanh %216 : vector<8x128xf32>
    %cst_108 = arith.constant 1.000000e+00 : f32
    %218 = vector.broadcast %cst_108 : f32 to vector<8x128xf32>
    %219 = arith.addf %217, %218 : vector<8x128xf32>
    %cst_109 = arith.constant 5.000000e-01 : f32
    %220 = vector.broadcast %cst_109 : f32 to vector<8x128xf32>
    %221 = arith.mulf %220, %219 : vector<8x128xf32>
    %222 = math.tanh %202 : vector<8x128xf32>
    %223 = vector.extract_strided_slice %221 {offsets = [0, 0], sizes = [8, 32], strides = [1, 1]} : vector<8x128xf32> to vector<8x32xf32>
    %224 = vector.extract_strided_slice %221 {offsets = [0, 32], sizes = [8, 32], strides = [1, 1]} : vector<8x128xf32> to vector<8x32xf32>
    %225 = vector.extract_strided_slice %221 {offsets = [0, 96], sizes = [8, 32], strides = [1, 1]} : vector<8x128xf32> to vector<8x32xf32>
    %226 = vector.extract_strided_slice %222 {offsets = [0, 64], sizes = [8, 32], strides = [1, 1]} : vector<8x128xf32> to vector<8x32xf32>
    %227 = arith.mulf %212, %174 : vector<8x32xf32>
    %228 = arith.mulf %211, %214 : vector<8x32xf32>
    %229 = arith.addf %227, %228 : vector<8x32xf32>
    %230 = arith.mulf %224, %177 : vector<8x32xf32>
    %231 = arith.mulf %223, %226 : vector<8x32xf32>
    %232 = arith.addf %230, %231 : vector<8x32xf32>
    %233 = math.tanh %229 : vector<8x32xf32>
    %234 = arith.mulf %213, %233 : vector<8x32xf32>
    %235 = math.tanh %232 : vector<8x32xf32>
    %236 = arith.mulf %225, %235 : vector<8x32xf32>
    %237 = arith.index_cast %c3_i32_92 : i32 to index
    %c0_110 = arith.constant 0 : index
    %c0_111 = arith.constant 0 : index
    %238 = vector.load %arg10[%237, %c0_110, %c0_111] : memref<4x8x32xf32, #tpu.memory_space<vmem>>, vector<1x8x32xf32>
    %239 = vector.shape_cast %238 : vector<1x8x32xf32> to vector<8x32xf32>
    %240 = vector.shape_cast %234 : vector<8x32xf32> to vector<1x8x32xf32>
    tpu.vector_store %arg10[%237, %c0_110, %c0_111], %240 {strides = array<i32>} : memref<4x8x32xf32, #tpu.memory_space<vmem>>, vector<1x8x32xf32>,
    %241 = arith.index_cast %190 : i32 to index
    %c0_112 = arith.constant 0 : index
    %c0_113 = arith.constant 0 : index
    %242 = vector.load %arg11[%241, %c0_112, %c0_113] : memref<4x8x32xf32, #tpu.memory_space<vmem>>, vector<1x8x32xf32>
    %243 = vector.shape_cast %242 : vector<1x8x32xf32> to vector<8x32xf32>
    %244 = vector.shape_cast %236 : vector<8x32xf32> to vector<1x8x32xf32>
    tpu.vector_store %arg11[%241, %c0_112, %c0_113], %244 {strides = array<i32>} : memref<4x8x32xf32, #tpu.memory_space<vmem>>, vector<1x8x32xf32>,
    %c4_i32 = arith.constant 4 : i32
    %c0_114 = arith.constant 0 : index
    %c0_115 = arith.constant 0 : index
    %245 = vector.load %arg14[%c0_114, %c0_115] : memref<8x32xf32, #tpu.memory_space<vmem>>, vector<8x32xf32>
    tpu.vector_store %arg14[%c0_114, %c0_115], %234 {strides = array<i32>} : memref<8x32xf32, #tpu.memory_space<vmem>>, vector<8x32xf32>,
    %c0_116 = arith.constant 0 : index
    %c0_117 = arith.constant 0 : index
    %246 = vector.load %arg15[%c0_116, %c0_117] : memref<8x32xf32, #tpu.memory_space<vmem>>, vector<8x32xf32>
    tpu.vector_store %arg15[%c0_116, %c0_117], %229 {strides = array<i32>} : memref<8x32xf32, #tpu.memory_space<vmem>>, vector<8x32xf32>,
    %c0_118 = arith.constant 0 : index
    %c0_119 = arith.constant 0 : index
    %247 = vector.load %arg16[%c0_118, %c0_119] : memref<8x32xf32, #tpu.memory_space<vmem>>, vector<8x32xf32>
    tpu.vector_store %arg16[%c0_118, %c0_119], %236 {strides = array<i32>} : memref<8x32xf32, #tpu.memory_space<vmem>>, vector<8x32xf32>,
    %c0_120 = arith.constant 0 : index
    %c0_121 = arith.constant 0 : index
    %248 = vector.load %arg17[%c0_120, %c0_121] : memref<8x32xf32, #tpu.memory_space<vmem>>, vector<8x32xf32>
    tpu.vector_store %arg17[%c0_120, %c0_121], %232 {strides = array<i32>} : memref<8x32xf32, #tpu.memory_space<vmem>>, vector<8x32xf32>,
    return
  }
  func.func @transform_0(%arg0: i32, %arg1: i32) -> (i32, i32, i32) {
    %c0_i32 = arith.constant 0 : i32
    %c0_i32_0 = arith.constant 0 : i32
    return %arg1, %arg0, %c0_i32 : i32, i32, i32
  }
  func.func @transform_1(%arg0: i32, %arg1: i32) -> (i32, i32, i32) {
    %c1_i32 = arith.constant 1 : i32
    %0 = arith.subi %c1_i32, %arg1 : i32
    %c0_i32 = arith.constant 0 : i32
    %c0_i32_0 = arith.constant 0 : i32
    return %0, %arg0, %c0_i32 : i32, i32, i32
  }
  func.func @transform_2(%arg0: i32, %arg1: i32) -> (i32, i32) {
    %c0_i32 = arith.constant 0 : i32
    %c0_i32_0 = arith.constant 0 : i32
    %c0_i32_1 = arith.constant 0 : i32
    return %c0_i32, %c0_i32_0 : i32, i32
  }
  func.func @transform_3(%arg0: i32, %arg1: i32) -> (i32, i32) {
    %c0_i32 = arith.constant 0 : i32
    %c0_i32_0 = arith.constant 0 : i32
    %c0_i32_1 = arith.constant 0 : i32
    return %c0_i32, %c0_i32_0 : i32, i32
  }
  func.func @transform_4(%arg0: i32, %arg1: i32) -> (i32, i32) {
    %c0_i32 = arith.constant 0 : i32
    %c0_i32_0 = arith.constant 0 : i32
    %c0_i32_1 = arith.constant 0 : i32
    return %c0_i32, %c0_i32_0 : i32, i32
  }
  func.func @transform_5(%arg0: i32, %arg1: i32) -> (i32, i32) {
    %c0_i32 = arith.constant 0 : i32
    %c0_i32_0 = arith.constant 0 : i32
    %c0_i32_1 = arith.constant 0 : i32
    return %c0_i32, %c0_i32_0 : i32, i32
  }
  func.func @transform_6(%arg0: i32, %arg1: i32) -> (i32, i32) {
    %c0_i32 = arith.constant 0 : i32
    %c0_i32_0 = arith.constant 0 : i32
    %c0_i32_1 = arith.constant 0 : i32
    return %c0_i32, %c0_i32_0 : i32, i32
  }
  func.func @transform_7(%arg0: i32, %arg1: i32) -> (i32, i32) {
    %c0_i32 = arith.constant 0 : i32
    %c0_i32_0 = arith.constant 0 : i32
    %c0_i32_1 = arith.constant 0 : i32
    return %c0_i32, %c0_i32_0 : i32, i32
  }
  func.func @transform_8(%arg0: i32, %arg1: i32) -> (i32, i32, i32) {
    %c0_i32 = arith.constant 0 : i32
    %c0_i32_0 = arith.constant 0 : i32
    return %arg1, %arg0, %c0_i32 : i32, i32, i32
  }
  func.func @transform_9(%arg0: i32, %arg1: i32) -> (i32, i32, i32) {
    %c1_i32 = arith.constant 1 : i32
    %0 = arith.subi %c1_i32, %arg1 : i32
    %c0_i32 = arith.constant 0 : i32
    %c0_i32_0 = arith.constant 0 : i32
    return %0, %arg0, %c0_i32 : i32, i32, i32
  }
}

</mosaic_0001>

<llo_original>
// kernel: tpu_custom_call.1
$region0: #{tpu_custom_call.1}
  #allocation0 [shape = 'u32[]', space=smem, size = 0x4, offset = 0x4, fixed_abs, tag = 'smem constant byte address 0x4 - core index']
  #allocation1 [shape = 'u32[144,128]{1,0:T(1,128)}', space=vmem, size = 0x12000, scoped, tag = 'internal scratch']
  #allocation2 [shape = 'f32[4,8,128]{2,1,0:T(8,128)}', space=vmem, size = 0x4000, scoped, tag = 'scratch operand']
  #allocation3 [shape = 'f32[4,8,128]{2,1,0:T(8,128)}', space=vmem, size = 0x4000, scoped, tag = 'scratch operand']
  #allocation4 [shape = 'f32[8,32]{1,0:T(8,128)}', space=vmem, size = 0x1000, scoped, tag = 'scratch operand']
  #allocation5 [shape = 'f32[8,32]{1,0:T(8,128)}', space=vmem, size = 0x1000, scoped, tag = 'scratch operand']
  #allocation6 [shape = 'f32[8,32]{1,0:T(8,128)}', space=vmem, size = 0x1000, scoped, tag = 'scratch operand']
  #allocation7 [shape = 'f32[8,32]{1,0:T(8,128)}', space=vmem, size = 0x1000, scoped, tag = 'scratch operand']
  %s0 = inlined_call_operand.hbm [shape: f32[8,8,16], index: 0, kind: input, shape index: {}]
  %s1 = inlined_call_operand.hbm [shape: f32[8,8,16], index: 1, kind: input, shape index: {}]
  %s2 = inlined_call_operand.hbm [shape: f32[16,128], index: 2, kind: input, shape index: {}]
  %s3 = inlined_call_operand.hbm [shape: f32[32,128], index: 3, kind: input, shape index: {}]
  %s4 = inlined_call_operand.vmem [shape: f32[1,128], index: 4, kind: input, shape index: {}]
  %s5 = inlined_call_operand.hbm [shape: f32[16,128], index: 5, kind: input, shape index: {}]
  %s6 = inlined_call_operand.hbm [shape: f32[32,128], index: 6, kind: input, shape index: {}]
  %s7 = inlined_call_operand.vmem [shape: f32[1,128], index: 7, kind: input, shape index: {}]
  %s8 = inlined_call_operand.hbm [shape: f32[8,8,32], index: 8, kind: output, shape index: {0}]
  %s9 = inlined_call_operand.hbm [shape: f32[8,8,32], index: 9, kind: output, shape index: {1}]
  %10 = xla_tuple %s8, %s9
  %s11 = sld [smem:[#allocation0]]
  $region101: #{tpu_custom_call.1} parent=0
    _
  %s13 = ssub.s32 1, %s11
  %s14 = scalar_select 0, %s13, %s11
  $region1: #{tpu_custom_call.1} parent=0
    #allocation8 [shape = 'u8[32768]{0}', space=vmem, size = 0x8000, scoped, tag = 'input window, operand 0']
    #allocation9 [shape = 's32[2]{0}', space=sflag, size = 0x8, scoped, tag = 'scoped memory for tpu_custom_call.1']
    #allocation10 [shape = 's32[2]{0}', space=sflag, size = 0x8, scoped, tag = 'scoped memory for tpu_custom_call.1']
    #allocation11 [shape = 'u8[32768]{0}', space=vmem, size = 0x8000, scoped, tag = 'input window, operand 1']
    #allocation12 [shape = 's32[2]{0}', space=sflag, size = 0x8, scoped, tag = 'scoped memory for tpu_custom_call.1']
    #allocation13 [shape = 'u8[8192]{0}', space=vmem, size = 0x2000, scoped, tag = 'input window, operand 2, single buffered']
    #allocation14 [shape = 'u8[16384]{0}', space=vmem, size = 0x4000, scoped, tag = 'input window, operand 3, single buffered']
    #allocation15 [shape = 's32[1]{0}', space=sflag, size = 0x4, scoped, tag = 'scoped memory for tpu_custom_call.1']
    #allocation16 [shape = 'u8[8192]{0}', space=vmem, size = 0x2000, scoped, tag = 'input window, operand 5, single buffered']
    #allocation17 [shape = 'u8[16384]{0}', space=vmem, size = 0x4000, scoped, tag = 'input window, operand 6, single buffered']
    #allocation18 [shape = 's32[1]{0}', space=sflag, size = 0x4, scoped, tag = 'scoped memory for tpu_custom_call.1']
    #allocation19 [shape = 'u8[32768]{0}', space=vmem, size = 0x8000, scoped, tag = 'output window, operand 0']
    #allocation20 [shape = 'u8[32768]{0}', space=vmem, size = 0x8000, scoped, tag = 'output window, operand 1']
    #allocation21 [shape = 's32[2]{0}', space=sflag, size = 0x8, scoped, tag = 'scoped memory for tpu_custom_call.1']
    %15 = vsyncpa [#allocation9], 0
    %s16 = scalar_lea.sflag [#allocation9], 1
    %17 = vsyncpa %s16, 0
    %18 = vsyncpa [#allocation12], 0
    %s19 = scalar_lea.sflag [#allocation12], 1
    %20 = vsyncpa %s19, 0
    %21 = vsyncpa [#allocation15], 0
    %22 = vsyncpa [#allocation18], 0
    %23 = vsyncpa [#allocation10], 0
    %s24 = scalar_lea.sflag [#allocation10], 1
    %25 = vsyncpa %s24, 0
    %26 = vsyncpa [#allocation21], 0
    %s27 = scalar_lea.sflag [#allocation21], 1
    %28 = vsyncpa %s27, 0
    loop: start=0, step=1, limit=4
    $region2: #{tpu_custom_call.1} parent=1 // loop_pre_header
      _
    $region3: #{tpu_custom_call.1} parent=1 // loop_header
      %s30 = sphi 0, %s34
      %p31 = scmp.ge.s32.totalorder %s30, 4
      %s37 = sphi 0, %s49
      %s38 = sphi 0, %s45
      %s39 = sphi 0, %s37
      %s40 = sphi 0, %s38
      %s41 = sphi 0, %s39
      %s42 = sphi 0, %s40
      %s54 = sphi 0, %s56
      %s57 = sphi 0, %s54
      %s58 = sphi 0, %s57
      %s74 = sphi 0, %s58
      %s84 = sphi 0, %s86
      %s87 = sphi 0, %s84
      %s88 = sphi 0, %s87
      %s104 = sphi 0, %s88
      %s108 = sphi 0, %s108
      %s110 = sphi 0, %s108
      %s111 = sphi 0, %s110
      %s125 = sphi 0, %s111
      %s129 = sphi 0, %s129
      %s131 = sphi 0, %s129
      %s132 = sphi 0, %s131
      %s146 = sphi 0, %s132
      %s150 = sphi 0, %s150
      %s152 = sphi 0, %s150
      %s153 = sphi 0, %s152
      %s167 = sphi 0, %s153
      %s171 = sphi 0, %s171
      %s173 = sphi 0, %s171
      %s174 = sphi 0, %s173
      %s188 = sphi 0, %s174
      %s192 = sphi 0, %s192
      %s194 = sphi 0, %s192
      %s195 = sphi 0, %s194
      %s209 = sphi 0, %s195
      %s213 = sphi 0, %s213
      %s215 = sphi 0, %s213
      %s216 = sphi 0, %s215
      %s230 = sphi 0, %s216
      %s238 = sphi 0, %s240
      %s241 = sphi 0, %s238
      %s242 = sphi 0, %s241
      %s258 = sphi 0, %s242
      %s268 = sphi 0, %s270
      %s271 = sphi 0, %s268
      %s272 = sphi 0, %s271
      %s288 = sphi 0, %s272
    $region4: #{tpu_custom_call.1} parent=1 // loop_header_branch
      %33 = sbr.rel (%p31) target = $region8
    $region5: #{tpu_custom_call.1} parent=1 // loop_body
      %s35 = ssub.s32 %s30, 1
      %s36 = ssub.s32 %s30, 2
      %s43 = sadd.s32 1, %s38
      %p44 = scmp.ge.s32.totalorder %s43, 2
      %s45 = scalar_select %p44, 0, %s43
      %s46 = sadd.s32 1, %s37
      %s47 = scalar_select %p44, %s46, %s37
      %p48 = scmp.ge.s32.totalorder %s47, 1
      %s49 = scalar_select %p48, 0, %s47
      %s50 = ssub.s32 %s38, %s45
      %s51 = ssub.s32 %s37, %s49
      %s52 = sor.u32 %s50, %s51
      %p53 = scmp.eq.s32.totalorder %s52, 0
      %s55 = sadd.s32 %s54, 1
      %s56 = scalar_select %p53, %s54, %s55
      %p59 = pneg %p53
      %p60 = scmp.eq.s32.totalorder %s30, 1
      %p61 = por %p59, %p60
      %p62 = scmp.ne.s32.totalorder %s54, %s57
      %p63 = scmp.eq.s32.totalorder %s30, 0
      %p64 = por %p62, %p63
      %p65 = scmp.ne.s32.totalorder %s54, %s57
      %p66 = scmp.eq.s32.totalorder %s35, 1
      %p67 = por %p65, %p66
      %p68 = scmp.ne.s32.totalorder %s57, %s58
      %p69 = scmp.eq.s32.totalorder %s35, 0
      %p70 = por %p68, %p69
      %p71 = scmp.ne.s32.totalorder %s57, %s58
      %p72 = scmp.eq.s32.totalorder %s36, 1
      %p73 = por %p71, %p72
      %p75 = scmp.ne.s32.totalorder %s58, %s74
      %p76 = scmp.eq.s32.totalorder %s36, 0
      %p77 = por %p75, %p76
      %s78 = ssub.s32 1, %s38
      %s79 = ssub.s32 1, %s45
      %s80 = ssub.s32 %s78, %s79
      %s81 = ssub.s32 %s37, %s49
      %s82 = sor.u32 %s80, %s81
      %p83 = scmp.eq.s32.totalorder %s82, 0
      %s85 = sadd.s32 %s84, 1
      %s86 = scalar_select %p83, %s84, %s85
      %p89 = pneg %p83
      %p90 = scmp.eq.s32.totalorder %s30, 1
      %p91 = por %p89, %p90
      %p92 = scmp.ne.s32.totalorder %s84, %s87
      %p93 = scmp.eq.s32.totalorder %s30, 0
      %p94 = por %p92, %p93
      %p95 = scmp.ne.s32.totalorder %s84, %s87
      %p96 = scmp.eq.s32.totalorder %s35, 1
      %p97 = por %p95, %p96
      %p98 = scmp.ne.s32.totalorder %s87, %s88
      %p99 = scmp.eq.s32.totalorder %s35, 0
      %p100 = por %p98, %p99
      %p101 = scmp.ne.s32.totalorder %s87, %s88
      %p102 = scmp.eq.s32.totalorder %s36, 1
      %p103 = por %p101, %p102
      %p105 = scmp.ne.s32.totalorder %s88, %s104
      %p106 = scmp.eq.s32.totalorder %s36, 0
      %p107 = por %p105, %p106
      %s109 = sadd.s32 %s108, 1
      %p112 = scmp.eq.s32.totalorder %s30, 1
      %p113 = scmp.ne.s32.totalorder %s108, %s110
      %p114 = scmp.eq.s32.totalorder %s30, 0
      %p115 = por %p113, %p114
      %p116 = scmp.ne.s32.totalorder %s108, %s110
      %p117 = scmp.eq.s32.totalorder %s35, 1
      %p118 = por %p116, %p117
      %p119 = scmp.ne.s32.totalorder %s110, %s111
      %p120 = scmp.eq.s32.totalorder %s35, 0
      %p121 = por %p119, %p120
      %p122 = scmp.ne.s32.totalorder %s110, %s111
      %p123 = scmp.eq.s32.totalorder %s36, 1
      %p124 = por %p122, %p123
      %p126 = scmp.ne.s32.totalorder %s111, %s125
      %p127 = scmp.eq.s32.totalorder %s36, 0
      %p128 = por %p126, %p127
      %s130 = sadd.s32 %s129, 1
      %p133 = scmp.eq.s32.totalorder %s30, 1
      %p134 = scmp.ne.s32.totalorder %s129, %s131
      %p135 = scmp.eq.s32.totalorder %s30, 0
      %p136 = por %p134, %p135
      %p137 = scmp.ne.s32.totalorder %s129, %s131
      %p138 = scmp.eq.s32.totalorder %s35, 1
      %p139 = por %p137, %p138
      %p140 = scmp.ne.s32.totalorder %s131, %s132
      %p141 = scmp.eq.s32.totalorder %s35, 0
      %p142 = por %p140, %p141
      %p143 = scmp.ne.s32.totalorder %s131, %s132
      %p144 = scmp.eq.s32.totalorder %s36, 1
      %p145 = por %p143, %p144
      %p147 = scmp.ne.s32.totalorder %s132, %s146
      %p148 = scmp.eq.s32.totalorder %s36, 0
      %p149 = por %p147, %p148
      %s151 = sadd.s32 %s150, 1
      %p154 = scmp.eq.s32.totalorder %s30, 1
      %p155 = scmp.ne.s32.totalorder %s150, %s152
      %p156 = scmp.eq.s32.totalorder %s30, 0
      %p157 = por %p155, %p156
      %p158 = scmp.ne.s32.totalorder %s150, %s152
      %p159 = scmp.eq.s32.totalorder %s35, 1
      %p160 = por %p158, %p159
      %p161 = scmp.ne.s32.totalorder %s152, %s153
      %p162 = scmp.eq.s32.totalorder %s35, 0
      %p163 = por %p161, %p162
      %p164 = scmp.ne.s32.totalorder %s152, %s153
      %p165 = scmp.eq.s32.totalorder %s36, 1
      %p166 = por %p164, %p165
      %p168 = scmp.ne.s32.totalorder %s153, %s167
      %p169 = scmp.eq.s32.totalorder %s36, 0
      %p170 = por %p168, %p169
      %s172 = sadd.s32 %s171, 1
      %p175 = scmp.eq.s32.totalorder %s30, 1
      %p176 = scmp.ne.s32.totalorder %s171, %s173
      %p177 = scmp.eq.s32.totalorder %s30, 0
      %p178 = por %p176, %p177
      %p179 = scmp.ne.s32.totalorder %s171, %s173
      %p180 = scmp.eq.s32.totalorder %s35, 1
      %p181 = por %p179, %p180
      %p182 = scmp.ne.s32.totalorder %s173, %s174
      %p183 = scmp.eq.s32.totalorder %s35, 0
      %p184 = por %p182, %p183
      %p185 = scmp.ne.s32.totalorder %s173, %s174
      %p186 = scmp.eq.s32.totalorder %s36, 1
      %p187 = por %p185, %p186
      %p189 = scmp.ne.s32.totalorder %s174, %s188
      %p190 = scmp.eq.s32.totalorder %s36, 0
      %p191 = por %p189, %p190
      %s193 = sadd.s32 %s192, 1
      %p196 = scmp.eq.s32.totalorder %s30, 1
      %p197 = scmp.ne.s32.totalorder %s192, %s194
      %p198 = scmp.eq.s32.totalorder %s30, 0
      %p199 = por %p197, %p198
      %p200 = scmp.ne.s32.totalorder %s192, %s194
      %p201 = scmp.eq.s32.totalorder %s35, 1
      %p202 = por %p200, %p201
      %p203 = scmp.ne.s32.totalorder %s194, %s195
      %p204 = scmp.eq.s32.totalorder %s35, 0
      %p205 = por %p203, %p204
      %p206 = scmp.ne.s32.totalorder %s194, %s195
      %p207 = scmp.eq.s32.totalorder %s36, 1
      %p208 = por %p206, %p207
      %p210 = scmp.ne.s32.totalorder %s195, %s209
      %p211 = scmp.eq.s32.totalorder %s36, 0
      %p212 = por %p210, %p211
      %s214 = sadd.s32 %s213, 1
      %p217 = scmp.eq.s32.totalorder %s30, 1
      %p218 = scmp.ne.s32.totalorder %s213, %s215
      %p219 = scmp.eq.s32.totalorder %s30, 0
      %p220 = por %p218, %p219
      %p221 = scmp.ne.s32.totalorder %s213, %s215
      %p222 = scmp.eq.s32.totalorder %s35, 1
      %p223 = por %p221, %p222
      %p224 = scmp.ne.s32.totalorder %s215, %s216
      %p225 = scmp.eq.s32.totalorder %s35, 0
      %p226 = por %p224, %p225
      %p227 = scmp.ne.s32.totalorder %s215, %s216
      %p228 = scmp.eq.s32.totalorder %s36, 1
      %p229 = por %p227, %p228
      %p231 = scmp.ne.s32.totalorder %s216, %s230
      %p232 = scmp.eq.s32.totalorder %s36, 0
      %p233 = por %p231, %p232
      %s234 = ssub.s32 %s38, %s45
      %s235 = ssub.s32 %s37, %s49
      %s236 = sor.u32 %s234, %s235
      %p237 = scmp.eq.s32.totalorder %s236, 0
      %s239 = sadd.s32 %s238, 1
      %s240 = scalar_select %p237, %s238, %s239
      %p243 = pneg %p237
      %p244 = scmp.eq.s32.totalorder %s30, 1
      %p245 = por %p243, %p244
      %p246 = scmp.ne.s32.totalorder %s238, %s241
      %p247 = scmp.eq.s32.totalorder %s30, 0
      %p248 = por %p246, %p247
      %p249 = scmp.ne.s32.totalorder %s238, %s241
      %p250 = scmp.eq.s32.totalorder %s35, 1
      %p251 = por %p249, %p250
      %p252 = scmp.ne.s32.totalorder %s241, %s242
      %p253 = scmp.eq.s32.totalorder %s35, 0
      %p254 = por %p252, %p253
      %p255 = scmp.ne.s32.totalorder %s241, %s242
      %p256 = scmp.eq.s32.totalorder %s36, 1
      %p257 = por %p255, %p256
      %p259 = scmp.ne.s32.totalorder %s242, %s258
      %p260 = scmp.eq.s32.totalorder %s36, 0
      %p261 = por %p259, %p260
      %s262 = ssub.s32 1, %s38
      %s263 = ssub.s32 1, %s45
      %s264 = ssub.s32 %s262, %s263
      %s265 = ssub.s32 %s37, %s49
      %s266 = sor.u32 %s264, %s265
      %p267 = scmp.eq.s32.totalorder %s266, 0
      %s269 = sadd.s32 %s268, 1
      %s270 = scalar_select %p267, %s268, %s269
      %p273 = pneg %p267
      %p274 = scmp.eq.s32.totalorder %s30, 1
      %p275 = por %p273, %p274
      %p276 = scmp.ne.s32.totalorder %s268, %s271
      %p277 = scmp.eq.s32.totalorder %s30, 0
      %p278 = por %p276, %p277
      %p279 = scmp.ne.s32.totalorder %s268, %s271
      %p280 = scmp.eq.s32.totalorder %s35, 1
      %p281 = por %p279, %p280
      %p282 = scmp.ne.s32.totalorder %s271, %s272
      %p283 = scmp.eq.s32.totalorder %s35, 0
      %p284 = por %p282, %p283
      %p285 = scmp.ne.s32.totalorder %s271, %s272
      %p286 = scmp.eq.s32.totalorder %s36, 1
      %p287 = por %p285, %p286
      %p289 = scmp.ne.s32.totalorder %s272, %s288
      %p290 = scmp.eq.s32.totalorder %s36, 0
      %p291 = por %p289, %p290
      %p292 = scmp.le.s32.totalorder 1, %s30
      %p293 = scmp.lt.s32.totalorder %s30, 3
      %p294 = pnand %p292, %p293
      %p295 = pneg %p294
      // Predicated region
      $region9: #{tpu_custom_call.1} parent=5 // pred_check
        _
      $region10: #{tpu_custom_call.1} parent=5 // pred_check_branch
        %297 = sbr.rel (%p294) target = $region12
      $region11: #{tpu_custom_call.1} parent=5 // pred_region
        %s298 = ssub.s32 %s30, 1
        // Predicated region
        $region13: #{tpu_custom_call.1} parent=11 // pred_check
          %p299 = pneg %p121
        $region14: #{tpu_custom_call.1} parent=11 // pred_check_branch
          %301 = sbr.rel (%p299) target = $region16
        $region15: #{tpu_custom_call.1} parent=11 // pred_region
          %s303 = ssub.s32 256, 256
          %304 = vsyncadd [#allocation12], %s303
          %s305 = sshll.u32 [#allocation13], 4
          %s306 = int_to_ptr.vmem [resolvable:$true] %s305
          %311 = dma.hbm_to_vmem [thread:$0]  %s2, 256, %s306, [#allocation12], 128, 128, 8
        $region16: #{tpu_custom_call.1} parent=11 // pred_fallthru
          _
        // Predicated region
        $region17: #{tpu_custom_call.1} parent=11 // pred_check
          %p312 = pneg %p142
        $region18: #{tpu_custom_call.1} parent=11 // pred_check_branch
          %314 = sbr.rel (%p312) target = $region20
        $region19: #{tpu_custom_call.1} parent=11 // pred_region
          %s316 = ssub.s32 512, 512
          %317 = vsyncadd [#allocation15], %s316
          %s318 = sshll.u32 [#allocation14], 4
          %s319 = int_to_ptr.vmem [resolvable:$true] %s318
          %324 = dma.hbm_to_vmem [thread:$0]  %s3, 512, %s319, [#allocation15], 128, 128, 8
        $region20: #{tpu_custom_call.1} parent=11 // pred_fallthru
          _
        // Predicated region
        $region21: #{tpu_custom_call.1} parent=11 // pred_check
          %p325 = pneg %p163
        $region22: #{tpu_custom_call.1} parent=11 // pred_check_branch
          %327 = sbr.rel (%p325) target = $region24
        $region23: #{tpu_custom_call.1} parent=11 // pred_region
          _
        $region24: #{tpu_custom_call.1} parent=11 // pred_fallthru
          _
        // Predicated region
        $region25: #{tpu_custom_call.1} parent=11 // pred_check
          %p328 = pneg %p184
        $region26: #{tpu_custom_call.1} parent=11 // pred_check_branch
          %330 = sbr.rel (%p328) target = $region28
        $region27: #{tpu_custom_call.1} parent=11 // pred_region
          %s332 = ssub.s32 256, 256
          %333 = vsyncadd [#allocation15], %s332
          %s334 = sshll.u32 [#allocation16], 4
          %s335 = int_to_ptr.vmem [resolvable:$true] %s334
          %340 = dma.hbm_to_vmem [thread:$0]  %s5, 256, %s335, [#allocation15], 128, 128, 8
        $region28: #{tpu_custom_call.1} parent=11 // pred_fallthru
          _
        // Predicated region
        $region29: #{tpu_custom_call.1} parent=11 // pred_check
          %p341 = pneg %p205
        $region30: #{tpu_custom_call.1} parent=11 // pred_check_branch
          %343 = sbr.rel (%p341) target = $region32
        $region31: #{tpu_custom_call.1} parent=11 // pred_region
          %s345 = ssub.s32 512, 512
          %346 = vsyncadd [#allocation18], %s345
          %s347 = sshll.u32 [#allocation17], 4
          %s348 = int_to_ptr.vmem [resolvable:$true] %s347
          %353 = dma.hbm_to_vmem [thread:$0]  %s6, 512, %s348, [#allocation18], 128, 128, 8
        $region32: #{tpu_custom_call.1} parent=11 // pred_fallthru
          _
        // Predicated region
        $region33: #{tpu_custom_call.1} parent=11 // pred_check
          %p354 = pneg %p226
        $region34: #{tpu_custom_call.1} parent=11 // pred_check_branch
          %356 = sbr.rel (%p354) target = $region36
        $region35: #{tpu_custom_call.1} parent=11 // pred_region
          _
        $region36: #{tpu_custom_call.1} parent=11 // pred_fallthru
          _
      $region12: #{tpu_custom_call.1} parent=5 // pred_fallthru
        _
      %p357 = scmp.lt.s32.totalorder %s30, 2
      // Predicated region
      $region37: #{tpu_custom_call.1} parent=5 // pred_check
        %p358 = pneg %p357
      $region38: #{tpu_custom_call.1} parent=5 // pred_check_branch
        %360 = sbr.rel (%p358) target = $region40
      $region39: #{tpu_custom_call.1} parent=5 // pred_region
        // Predicated region
        $region41: #{tpu_custom_call.1} parent=39 // pred_check
          %p361 = pneg %p64
        $region42: #{tpu_custom_call.1} parent=39 // pred_check_branch
          %363 = sbr.rel (%p361) target = $region44
        $region43: #{tpu_custom_call.1} parent=39 // pred_region
          %s364 = sand.u32 %s54, 1
          %s365 = scalar_lea.sflag [#allocation9], %s364
          %s366 = sand.u32 %s54, 1
          %s367 = smul.addr %s366, 32
          %s368 = scalar_lea.vmem [#allocation8], %s367
          %s369 = smul.u32 4, %s38
          %s371 = ssub.s32 512, 512
          %372 = vsyncadd %s365, %s371
          %s373 = sadd.s32 %s37, %s369
          %s374 = smul.addr %s373, 128
          %s375 = scalar_lea.hbm %s0, %s374
          %s376 = sshll.u32 %s368, 4
          %s377 = int_to_ptr.vmem [resolvable:$true] %s376
          %382 = dma.hbm_to_vmem [thread:$0]  %s375, 512, %s377, %s365, 128, 128, 8
        $region44: #{tpu_custom_call.1} parent=39 // pred_fallthru
          _
        // Predicated region
        $region45: #{tpu_custom_call.1} parent=39 // pred_check
          %p383 = pneg %p94
        $region46: #{tpu_custom_call.1} parent=39 // pred_check_branch
          %385 = sbr.rel (%p383) target = $region48
        $region47: #{tpu_custom_call.1} parent=39 // pred_region
          %s386 = sand.u32 %s30, 1
          %s387 = scalar_lea.sflag [#allocation12], %s386
          %s388 = sand.u32 %s84, 1
          %s389 = smul.addr %s388, 32
          %s390 = scalar_lea.vmem [#allocation11], %s389
          %s391 = ssub.s32 1, %s38
          %s392 = smul.u32 4, %s391
          %s394 = ssub.s32 512, 512
          %395 = vsyncadd %s387, %s394
          %s396 = sadd.s32 %s37, %s392
          %s397 = smul.addr %s396, 128
          %s398 = scalar_lea.hbm %s1, %s397
          %s399 = sshll.u32 %s390, 4
          %s400 = int_to_ptr.vmem [resolvable:$true] %s399
          %405 = dma.hbm_to_vmem [thread:$0]  %s398, 512, %s400, %s387, 128, 128, 8
        $region48: #{tpu_custom_call.1} parent=39 // pred_fallthru
          _
      $region40: #{tpu_custom_call.1} parent=5 // pred_fallthru
        _
      %p406 = scmp.le.s32.totalorder 1, %s30
      %p407 = scmp.lt.s32.totalorder %s30, 3
      %p408 = pnand %p406, %p407
      %p409 = pneg %p408
      // Predicated region
      $region49: #{tpu_custom_call.1} parent=5 // pred_check
        _
      $region50: #{tpu_custom_call.1} parent=5 // pred_check_branch
        %411 = sbr.rel (%p408) target = $region52
      $region51: #{tpu_custom_call.1} parent=5 // pred_region
        %s412 = ssub.s32 %s30, 1
        %s413 = sand.u32 %s57, 1
        %s414 = scalar_lea.sflag [#allocation9], %s413
        %s415 = sand.u32 %s57, 1
        %s416 = smul.addr %s415, 32
        %s417 = scalar_lea.vmem [#allocation8], %s416
        // Predicated region
        $region53: #{tpu_custom_call.1} parent=51 // pred_check
          %p418 = pneg %p70
        $region54: #{tpu_custom_call.1} parent=51 // pred_check_branch
          %420 = sbr.rel (%p418) target = $region56
        $region55: #{tpu_custom_call.1} parent=51 // pred_region
          %421 = dma.done %s414, 512
        $region56: #{tpu_custom_call.1} parent=51 // pred_fallthru
          _
        %s422 = sand.u32 %s35, 1
        %s423 = scalar_lea.sflag [#allocation12], %s422
        %s424 = sand.u32 %s87, 1
        %s425 = smul.addr %s424, 32
        %s426 = scalar_lea.vmem [#allocation11], %s425
        // Predicated region
        $region57: #{tpu_custom_call.1} parent=51 // pred_check
          %p427 = pneg %p100
        $region58: #{tpu_custom_call.1} parent=51 // pred_check_branch
          %429 = sbr.rel (%p427) target = $region60
        $region59: #{tpu_custom_call.1} parent=51 // pred_region
          %430 = dma.done %s423, 512
        $region60: #{tpu_custom_call.1} parent=51 // pred_fallthru
          _
        // Predicated region
        $region61: #{tpu_custom_call.1} parent=51 // pred_check
          %p431 = pneg %p121
        $region62: #{tpu_custom_call.1} parent=51 // pred_check_branch
          %433 = sbr.rel (%p431) target = $region64
        $region63: #{tpu_custom_call.1} parent=51 // pred_region
          %434 = dma.done [#allocation12], 256
        $region64: #{tpu_custom_call.1} parent=51 // pred_fallthru
          _
        // Predicated region
        $region65: #{tpu_custom_call.1} parent=51 // pred_check
          %p435 = pneg %p142
        $region66: #{tpu_custom_call.1} parent=51 // pred_check_branch
          %437 = sbr.rel (%p435) target = $region68
        $region67: #{tpu_custom_call.1} parent=51 // pred_region
          %438 = dma.done [#allocation15], 512
        $region68: #{tpu_custom_call.1} parent=51 // pred_fallthru
          _
        // Predicated region
        $region69: #{tpu_custom_call.1} parent=51 // pred_check
          %p439 = pneg %p184
        $region70: #{tpu_custom_call.1} parent=51 // pred_check_branch
          %441 = sbr.rel (%p439) target = $region72
        $region71: #{tpu_custom_call.1} parent=51 // pred_region
          %442 = dma.done [#allocation15], 256
        $region72: #{tpu_custom_call.1} parent=51 // pred_fallthru
          _
        // Predicated region
        $region73: #{tpu_custom_call.1} parent=51 // pred_check
          %p443 = pneg %p205
        $region74: #{tpu_custom_call.1} parent=51 // pred_check_branch
          %445 = sbr.rel (%p443) target = $region76
        $region75: #{tpu_custom_call.1} parent=51 // pred_region
          %446 = dma.done [#allocation18], 512
        $region76: #{tpu_custom_call.1} parent=51 // pred_fallthru
          _
        %s447 = sand.u32 %s57, 1
        %s448 = scalar_lea.sflag [#allocation9], %s447
        %s449 = sand.u32 %s57, 1
        %s450 = smul.addr %s449, 32
        %s451 = scalar_lea.vmem [#allocation8], %s450
        %p452 = pneg %p70
        %p453 = pneg %p67
        %s454 = sand.u32 %s35, 1
        %s455 = scalar_lea.sflag [#allocation12], %s454
        %s456 = sand.u32 %s87, 1
        %s457 = smul.addr %s456, 32
        %s458 = scalar_lea.vmem [#allocation11], %s457
        %p459 = pneg %p100
        %p460 = pneg %p97
        %p461 = pneg %p121
        %p462 = pneg %p118
        %p463 = pneg %p142
        %p464 = pneg %p139
        %p465 = pneg %p163
        %p466 = pneg %p160
        %p467 = pneg %p184
        %p468 = pneg %p181
        %p469 = pneg %p205
        %p470 = pneg %p202
        %p471 = pneg %p226
        %p472 = pneg %p223
        %p473 = pneg %p254
        %p474 = pneg %p251
        %s475 = sand.u32 %s241, 1
        %s476 = scalar_lea.sflag [#allocation10], %s475
        %s477 = sand.u32 %s241, 1
        %s478 = smul.addr %s477, 32
        %s479 = scalar_lea.vmem [#allocation19], %s478
        %p480 = pneg %p284
        %p481 = pneg %p281
        %s482 = sand.u32 %s271, 1
        %s483 = scalar_lea.sflag [#allocation21], %s482
        %s484 = sand.u32 %s271, 1
        %s485 = smul.addr %s484, 32
        %s486 = scalar_lea.vmem [#allocation20], %s485
        %s487 = smul.u32 4, %s40
        %s488 = ssub.s32 1, %s40
        %s489 = smul.u32 4, %s488
        %s490 = smul.u32 4, %s40
        %s491 = ssub.s32 1, %s40
        %s492 = smul.u32 4, %s491
        %p493 = scmp.eq.s32.totalorder %s40, 0
        // Predicated region
        $region77: #{tpu_custom_call.1} parent=51 // pred_check
          %p494 = pneg %p493
        $region78: #{tpu_custom_call.1} parent=51 // pred_check_branch
          %496 = sbr.rel (%p494) target = $region80
        $region79: #{tpu_custom_call.1} parent=51 // pred_region
          %vm497 = vcmask 261120
          %498 = vst.msk [vmem:[#allocation4] sm:$0xff] %vm497, 0.0
          %499 = vst.msk [vmem:[#allocation5] sm:$0xff] %vm497, 0.0
          %500 = vst.msk [vmem:[#allocation6] sm:$0xff] %vm497, 0.0
          %501 = vst.msk [vmem:[#allocation7] sm:$0xff] %vm497, 0.0
        $region80: #{tpu_custom_call.1} parent=51 // pred_fallthru
          _
        %v502 = vld [vmem:[%s417] sm:$0xff]
        %v503 = vld [vmem:[%s417 + $0x8] sm:$0xff]
        %v504 = vld [vmem:[%s417 + $0x10] sm:$0xff]
        %v505 = vld [vmem:[%s417 + $0x18] sm:$0xff]
        %v506 = vld [vmem:[%s426] sm:$0xff]
        %v507 = vld [vmem:[%s426 + $0x8] sm:$0xff]
        %v508 = vld [vmem:[%s426 + $0x10] sm:$0xff]
        %v509 = vld [vmem:[%s426 + $0x18] sm:$0xff]
        %v510 = vld [vmem:[#allocation13] sm:$0xff]
        %v511 = vld [vmem:[#allocation13 + $0x8] sm:$0xff]
        %v512 = vld [vmem:[%s4] sm:$0x1]
        %v514 = vlaneseq
        %v515 = vshrl.u32 %v514, 7
        %v516 = vsub.s32 0, %v515
        %v517 = vrot.slane %v512, %v516
        %vm519 = vcmask 130048
        %v521 = vsel %vm519, %v502, 0
        %v524 = vsel %vm519, %v503, 0
        %v527 = vsel %vm519, %v504, 0
        %v530 = vsel %vm519, %v505, 0
        %532 = vmatprep.subr.mxu0 0.0
        %533 = vmatpush1.msra.mxu0 0.0
        %534 = vmatprep.subr.mxu0 0.0
        %535 = vmatpush1.msra.mxu0 0.0
        %536 = vmatprep.subr.mxu0 0.0
        %537 = vmatpush1.msra.mxu0 0.0
        %538 = vmatprep.subr.mxu0 0.0
        %539 = vmatpush1.msra.mxu0 0.0
        %540 = vmatprep.subr.mxu0 0.0
        %541 = vmatpush1.msra.mxu0 0.0
        %542 = vmatprep.subr.mxu0 0.0
        %543 = vmatpush1.msra.mxu0 0.0
        %544 = vmatprep.subr.mxu0 0.0
        %545 = vmatpush1.msra.mxu0 0.0
        %546 = vmatprep.subr.mxu0 0.0
        %547 = vmatpush1.msra.mxu0 0.0
        %548 = vmatprep.subr.mxu0 0.0
        %549 = vmatpush1.msra.mxu0 0.0
        %550 = vmatprep.subr.mxu0 0.0
        %551 = vmatpush1.msra.mxu0 0.0
        %552 = vmatprep.subr.mxu0 0.0
        %553 = vmatpush1.msra.mxu0 0.0
        %554 = vmatprep.subr.mxu0 0.0
        %555 = vmatpush1.msra.mxu0 0.0
        %556 = vmatprep.subr.mxu0 0.0
        %557 = vmatpush1.msra.mxu0 0.0
        %558 = vmatprep.subr.mxu0 0.0
        %559 = vmatpush1.msra.mxu0 0.0
        %560 = vmatprep.subr.mxu0 0.0
        %561 = vmatpush1.msra.mxu0 %v511
        %562 = vmatprep.subr.mxu0 0.0
        %563 = vmatpush1.msra.mxu0 %v510
        %564 = vmatprep.subr.mxu0 0.0
        %565 = vmatpush2.msra.mxu0 0.0
        %566 = vmatprep.subr.mxu0 0.0
        %567 = vmatpush2.msra.mxu0 0.0
        %568 = vmatprep.subr.mxu0 0.0
        %569 = vmatpush2.msra.mxu0 0.0
        %570 = vmatprep.subr.mxu0 0.0
        %571 = vmatpush2.msra.mxu0 0.0
        %572 = vmatprep.subr.mxu0 0.0
        %573 = vmatpush2.msra.mxu0 0.0
        %574 = vmatprep.subr.mxu0 0.0
        %575 = vmatpush2.msra.mxu0 0.0
        %576 = vmatprep.subr.mxu0 0.0
        %577 = vmatpush2.msra.mxu0 0.0
        %578 = vmatprep.subr.mxu0 0.0
        %579 = vmatpush2.msra.mxu0 0.0
        %580 = vmatprep.subr.mxu0 0.0
        %581 = vmatpush2.msra.mxu0 0.0
        %582 = vmatprep.subr.mxu0 0.0
        %583 = vmatpush2.msra.mxu0 0.0
        %584 = vmatprep.subr.mxu0 0.0
        %585 = vmatpush2.msra.mxu0 0.0
        %586 = vmatprep.subr.mxu0 0.0
        %587 = vmatpush2.msra.mxu0 0.0
        %588 = vmatprep.subr.mxu0 0.0
        %589 = vmatpush2.msra.mxu0 0.0
        %590 = vmatprep.subr.mxu0 0.0
        %591 = vmatpush2.msra.mxu0 0.0
        %592 = vmatprep.subr.mxu0 0.0
        %593 = vmatpush2.msra.mxu0 0.0
        %594 = vmatprep.subr.mxu0 0.0
        %595 = vmatpush2.msra.mxu0 0.0
        %596 = vmatprep.mubr.f32.mxu0 0.0
        %597 = vmatmul.mubr.f32.gmra.mxu0 %v521
        %v598 = vpop.f32.mrf.mxu0
        %v599 = vadd.f32 %v517, %v598
        %v600 = vpop.f32.mrf.mxu0
        %601 = vmatprep.mubr.f32.mxu0 0.0
        %602 = vmatmul.mubr.f32.gmra.mxu0 %v524
        %v603 = vpop.f32.mrf.mxu0
        %v604 = vadd.f32 %v517, %v603
        %v605 = vpop.f32.mrf.mxu0
        %606 = vmatprep.mubr.f32.mxu0 0.0
        %607 = vmatmul.mubr.f32.gmra.mxu0 %v527
        %v608 = vpop.f32.mrf.mxu0
        %v609 = vadd.f32 %v517, %v608
        %v610 = vpop.f32.mrf.mxu0
        %611 = vmatprep.mubr.f32.mxu0 0.0
        %612 = vmatmul.mubr.f32.gmra.mxu0 %v530
        %v613 = vpop.f32.mrf.mxu0
        %v614 = vadd.f32 %v517, %v613
        %v615 = vpop.f32.mrf.mxu0
        %616 = vdwg.mxu0
        %617 = vst [vmem:[#allocation2] sm:$0xff] %v599
        %618 = vst [vmem:[#allocation2 + $0x8] sm:$0xff] %v604
        %619 = vst [vmem:[#allocation2 + $0x10] sm:$0xff] %v609
        %620 = vst [vmem:[#allocation2 + $0x18] sm:$0xff] %v614
        %v621 = vld [vmem:[#allocation16] sm:$0xff]
        %v622 = vld [vmem:[#allocation16 + $0x8] sm:$0xff]
        %v623 = vld [vmem:[%s7] sm:$0x1]
        %v625 = vlaneseq
        %v626 = vshrl.u32 %v625, 7
        %v627 = vsub.s32 0, %v626
        %v628 = vrot.slane %v623, %v627
        %v631 = vsel %vm519, %v506, 0
        %v634 = vsel %vm519, %v507, 0
        %v637 = vsel %vm519, %v508, 0
        %v640 = vsel %vm519, %v509, 0
        %642 = vmatprep.subr.mxu0 0.0
        %643 = vmatpush1.msra.mxu0 0.0
        %644 = vmatprep.subr.mxu0 0.0
        %645 = vmatpush1.msra.mxu0 0.0
        %646 = vmatprep.subr.mxu0 0.0
        %647 = vmatpush1.msra.mxu0 0.0
        %648 = vmatprep.subr.mxu0 0.0
        %649 = vmatpush1.msra.mxu0 0.0
        %650 = vmatprep.subr.mxu0 0.0
        %651 = vmatpush1.msra.mxu0 0.0
        %652 = vmatprep.subr.mxu0 0.0
        %653 = vmatpush1.msra.mxu0 0.0
        %654 = vmatprep.subr.mxu0 0.0
        %655 = vmatpush1.msra.mxu0 0.0
        %656 = vmatprep.subr.mxu0 0.0
        %657 = vmatpush1.msra.mxu0 0.0
        %658 = vmatprep.subr.mxu0 0.0
        %659 = vmatpush1.msra.mxu0 0.0
        %660 = vmatprep.subr.mxu0 0.0
        %661 = vmatpush1.msra.mxu0 0.0
        %662 = vmatprep.subr.mxu0 0.0
        %663 = vmatpush1.msra.mxu0 0.0
        %664 = vmatprep.subr.mxu0 0.0
        %665 = vmatpush1.msra.mxu0 0.0
        %666 = vmatprep.subr.mxu0 0.0
        %667 = vmatpush1.msra.mxu0 0.0
        %668 = vmatprep.subr.mxu0 0.0
        %669 = vmatpush1.msra.mxu0 0.0
        %670 = vmatprep.subr.mxu0 0.0
        %671 = vmatpush1.msra.mxu0 %v622
        %672 = vmatprep.subr.mxu0 0.0
        %673 = vmatpush1.msra.mxu0 %v621
        %674 = vmatprep.subr.mxu0 0.0
        %675 = vmatpush2.msra.mxu0 0.0
        %676 = vmatprep.subr.mxu0 0.0
        %677 = vmatpush2.msra.mxu0 0.0
        %678 = vmatprep.subr.mxu0 0.0
        %679 = vmatpush2.msra.mxu0 0.0
        %680 = vmatprep.subr.mxu0 0.0
        %681 = vmatpush2.msra.mxu0 0.0
        %682 = vmatprep.subr.mxu0 0.0
        %683 = vmatpush2.msra.mxu0 0.0
        %684 = vmatprep.subr.mxu0 0.0
        %685 = vmatpush2.msra.mxu0 0.0
        %686 = vmatprep.subr.mxu0 0.0
        %687 = vmatpush2.msra.mxu0 0.0
        %688 = vmatprep.subr.mxu0 0.0
        %689 = vmatpush2.msra.mxu0 0.0
        %690 = vmatprep.subr.mxu0 0.0
        %691 = vmatpush2.msra.mxu0 0.0
        %692 = vmatprep.subr.mxu0 0.0
        %693 = vmatpush2.msra.mxu0 0.0
        %694 = vmatprep.subr.mxu0 0.0
        %695 = vmatpush2.msra.mxu0 0.0
        %696 = vmatprep.subr.mxu0 0.0
        %697 = vmatpush2.msra.mxu0 0.0
        %698 = vmatprep.subr.mxu0 0.0
        %699 = vmatpush2.msra.mxu0 0.0
        %700 = vmatprep.subr.mxu0 0.0
        %701 = vmatpush2.msra.mxu0 0.0
        %702 = vmatprep.subr.mxu0 0.0
        %703 = vmatpush2.msra.mxu0 0.0
        %704 = vmatprep.subr.mxu0 0.0
        %705 = vmatpush2.msra.mxu0 0.0
        %706 = vmatprep.mubr.f32.mxu0 0.0
        %707 = vmatmul.mubr.f32.gmra.mxu0 %v631
        %v708 = vpop.f32.mrf.mxu0
        %v709 = vadd.f32 %v628, %v708
        %v710 = vpop.f32.mrf.mxu0
        %711 = vmatprep.mubr.f32.mxu0 0.0
        %712 = vmatmul.mubr.f32.gmra.mxu0 %v634
        %v713 = vpop.f32.mrf.mxu0
        %v714 = vadd.f32 %v628, %v713
        %v715 = vpop.f32.mrf.mxu0
        %716 = vmatprep.mubr.f32.mxu0 0.0
        %717 = vmatmul.mubr.f32.gmra.mxu0 %v637
        %v718 = vpop.f32.mrf.mxu0
        %v719 = vadd.f32 %v628, %v718
        %v720 = vpop.f32.mrf.mxu0
        %721 = vmatprep.mubr.f32.mxu0 0.0
        %722 = vmatmul.mubr.f32.gmra.mxu0 %v640
        %v723 = vpop.f32.mrf.mxu0
        %v724 = vadd.f32 %v628, %v723
        %v725 = vpop.f32.mrf.mxu0
        %726 = vdwg.mxu0
        %727 = vst [vmem:[#allocation3] sm:$0xff] %v709
        %728 = vst [vmem:[#allocation3 + $0x8] sm:$0xff] %v714
        %729 = vst [vmem:[#allocation3 + $0x10] sm:$0xff] %v719
        %730 = vst [vmem:[#allocation3 + $0x18] sm:$0xff] %v724
        %v731 = vld [vmem:[#allocation4] sm:$0xff]
        %v732 = vld [vmem:[#allocation5] sm:$0xff]
        %v733 = vld [vmem:[#allocation6] sm:$0xff]
        %v734 = vld [vmem:[#allocation7] sm:$0xff]
        %v735 = vld [vmem:[#allocation2] sm:$0xff]
        %v736 = vld [vmem:[#allocation14] sm:$0xff]
        %v737 = vld [vmem:[#allocation14 + $0x8] sm:$0xff]
        %v738 = vld [vmem:[#allocation14 + $0x10] sm:$0xff]
        %v739 = vld [vmem:[#allocation14 + $0x18] sm:$0xff]
        %vm740 = vcmask 261120
        %v742 = vsel %vm740, %v731, 0
        %744 = vmatprep.subr.mxu0 0.0
        %745 = vmatpush1.msra.mxu0 0.0
        %746 = vmatprep.subr.mxu0 0.0
        %747 = vmatpush1.msra.mxu0 0.0
        %748 = vmatprep.subr.mxu0 0.0
        %749 = vmatpush1.msra.mxu0 0.0
        %750 = vmatprep.subr.mxu0 0.0
        %751 = vmatpush1.msra.mxu0 0.0
        %752 = vmatprep.subr.mxu0 0.0
        %753 = vmatpush1.msra.mxu0 0.0
        %754 = vmatprep.subr.mxu0 0.0
        %755 = vmatpush1.msra.mxu0 0.0
        %756 = vmatprep.subr.mxu0 0.0
        %757 = vmatpush1.msra.mxu0 0.0
        %758 = vmatprep.subr.mxu0 0.0
        %759 = vmatpush1.msra.mxu0 0.0
        %760 = vmatprep.subr.mxu0 0.0
        %761 = vmatpush1.msra.mxu0 0.0
        %762 = vmatprep.subr.mxu0 0.0
        %763 = vmatpush1.msra.mxu0 0.0
        %764 = vmatprep.subr.mxu0 0.0
        %765 = vmatpush1.msra.mxu0 0.0
        %766 = vmatprep.subr.mxu0 0.0
        %767 = vmatpush1.msra.mxu0 0.0
        %768 = vmatprep.subr.mxu0 0.0
        %769 = vmatpush1.msra.mxu0 %v739
        %770 = vmatprep.subr.mxu0 0.0
        %771 = vmatpush1.msra.mxu0 %v738
        %772 = vmatprep.subr.mxu0 0.0
        %773 = vmatpush1.msra.mxu0 %v737
        %774 = vmatprep.subr.mxu0 0.0
        %775 = vmatpush1.msra.mxu0 %v736
        %776 = vmatprep.subr.mxu0 0.0
        %777 = vmatpush2.msra.mxu0 0.0
        %778 = vmatprep.subr.mxu0 0.0
        %779 = vmatpush2.msra.mxu0 0.0
        %780 = vmatprep.subr.mxu0 0.0
        %781 = vmatpush2.msra.mxu0 0.0
        %782 = vmatprep.subr.mxu0 0.0
        %783 = vmatpush2.msra.mxu0 0.0
        %784 = vmatprep.subr.mxu0 0.0
        %785 = vmatpush2.msra.mxu0 0.0
        %786 = vmatprep.subr.mxu0 0.0
        %787 = vmatpush2.msra.mxu0 0.0
        %788 = vmatprep.subr.mxu0 0.0
        %789 = vmatpush2.msra.mxu0 0.0
        %790 = vmatprep.subr.mxu0 0.0
        %791 = vmatpush2.msra.mxu0 0.0
        %792 = vmatprep.subr.mxu0 0.0
        %793 = vmatpush2.msra.mxu0 0.0
        %794 = vmatprep.subr.mxu0 0.0
        %795 = vmatpush2.msra.mxu0 0.0
        %796 = vmatprep.subr.mxu0 0.0
        %797 = vmatpush2.msra.mxu0 0.0
        %798 = vmatprep.subr.mxu0 0.0
        %799 = vmatpush2.msra.mxu0 0.0
        %800 = vmatprep.subr.mxu0 0.0
        %801 = vmatpush2.msra.mxu0 0.0
        %802 = vmatprep.subr.mxu0 0.0
        %803 = vmatpush2.msra.mxu0 0.0
        %804 = vmatprep.subr.mxu0 0.0
        %805 = vmatpush2.msra.mxu0 0.0
        %806 = vmatprep.subr.mxu0 0.0
        %807 = vmatpush2.msra.mxu0 0.0
        %808 = vmatprep.mubr.f32.mxu0 0.0
        %809 = vmatmul.mubr.f32.gmra.mxu0 %v742
        %v810 = vpop.f32.mrf.mxu0
        %v811 = vadd.f32 0.0, %v810
        %v812 = vpop.f32.mrf.mxu0
        %813 = vdwg.mxu0
        %v814 = vadd.f32 %v735, %v811
        %s815 = scalar_lea.vmem [#allocation3], 24
        %v816 = vld [vmem:[%s815] sm:$0xff]
        %v817 = vld [vmem:[#allocation17] sm:$0xff]
        %v818 = vld [vmem:[#allocation17 + $0x8] sm:$0xff]
        %v819 = vld [vmem:[#allocation17 + $0x10] sm:$0xff]
        %v820 = vld [vmem:[#allocation17 + $0x18] sm:$0xff]
        %v822 = vsel %vm740, %v733, 0
        %824 = vmatprep.subr.mxu0 0.0
        %825 = vmatpush1.msra.mxu0 0.0
        %826 = vmatprep.subr.mxu0 0.0
        %827 = vmatpush1.msra.mxu0 0.0
        %828 = vmatprep.subr.mxu0 0.0
        %829 = vmatpush1.msra.mxu0 0.0
        %830 = vmatprep.subr.mxu0 0.0
        %831 = vmatpush1.msra.mxu0 0.0
        %832 = vmatprep.subr.mxu0 0.0
        %833 = vmatpush1.msra.mxu0 0.0
        %834 = vmatprep.subr.mxu0 0.0
        %835 = vmatpush1.msra.mxu0 0.0
        %836 = vmatprep.subr.mxu0 0.0
        %837 = vmatpush1.msra.mxu0 0.0
        %838 = vmatprep.subr.mxu0 0.0
        %839 = vmatpush1.msra.mxu0 0.0
        %840 = vmatprep.subr.mxu0 0.0
        %841 = vmatpush1.msra.mxu0 0.0
        %842 = vmatprep.subr.mxu0 0.0
        %843 = vmatpush1.msra.mxu0 0.0
        %844 = vmatprep.subr.mxu0 0.0
        %845 = vmatpush1.msra.mxu0 0.0
        %846 = vmatprep.subr.mxu0 0.0
        %847 = vmatpush1.msra.mxu0 0.0
        %848 = vmatprep.subr.mxu0 0.0
        %849 = vmatpush1.msra.mxu0 %v820
        %850 = vmatprep.subr.mxu0 0.0
        %851 = vmatpush1.msra.mxu0 %v819
        %852 = vmatprep.subr.mxu0 0.0
        %853 = vmatpush1.msra.mxu0 %v818
        %854 = vmatprep.subr.mxu0 0.0
        %855 = vmatpush1.msra.mxu0 %v817
        %856 = vmatprep.subr.mxu0 0.0
        %857 = vmatpush2.msra.mxu0 0.0
        %858 = vmatprep.subr.mxu0 0.0
        %859 = vmatpush2.msra.mxu0 0.0
        %860 = vmatprep.subr.mxu0 0.0
        %861 = vmatpush2.msra.mxu0 0.0
        %862 = vmatprep.subr.mxu0 0.0
        %863 = vmatpush2.msra.mxu0 0.0
        %864 = vmatprep.subr.mxu0 0.0
        %865 = vmatpush2.msra.mxu0 0.0
        %866 = vmatprep.subr.mxu0 0.0
        %867 = vmatpush2.msra.mxu0 0.0
        %868 = vmatprep.subr.mxu0 0.0
        %869 = vmatpush2.msra.mxu0 0.0
        %870 = vmatprep.subr.mxu0 0.0
        %871 = vmatpush2.msra.mxu0 0.0
        %872 = vmatprep.subr.mxu0 0.0
        %873 = vmatpush2.msra.mxu0 0.0
        %874 = vmatprep.subr.mxu0 0.0
        %875 = vmatpush2.msra.mxu0 0.0
        %876 = vmatprep.subr.mxu0 0.0
        %877 = vmatpush2.msra.mxu0 0.0
        %878 = vmatprep.subr.mxu0 0.0
        %879 = vmatpush2.msra.mxu0 0.0
        %880 = vmatprep.subr.mxu0 0.0
        %881 = vmatpush2.msra.mxu0 0.0
        %882 = vmatprep.subr.mxu0 0.0
        %883 = vmatpush2.msra.mxu0 0.0
        %884 = vmatprep.subr.mxu0 0.0
        %885 = vmatpush2.msra.mxu0 0.0
        %886 = vmatprep.subr.mxu0 0.0
        %887 = vmatpush2.msra.mxu0 0.0
        %888 = vmatprep.mubr.f32.mxu0 0.0
        %889 = vmatmul.mubr.f32.gmra.mxu0 %v822
        %v890 = vpop.f32.mrf.mxu0
        %v891 = vadd.f32 0.0, %v890
        %v892 = vpop.f32.mrf.mxu0
        %893 = vdwg.mxu0
        %v894 = vadd.f32 %v816, %v891
        %v895 = vmul.f32 %v814, 0.5
        %v896 = vtanh.pop %v895
        %v897 = vadd.f32 %v896, 1.0
        %v898 = vmul.f32 %v897, 0.5
        %v899 = vtanh.pop %v814
        %v900 = vmul.f32 %v894, 0.5
        %v901 = vtanh.pop %v900
        %v902 = vadd.f32 %v901, 1.0
        %v903 = vmul.f32 %v902, 0.5
        %v904 = vtanh.pop %v894
        %906 = vrot.lane.b32.xlu0 %v732, 32
        %v907 = vpop.permute.xlu0 %906
        %v909 = vmul.f32 %v898, %v907
        %911 = vrot.lane.b32.xlu0 %v899, 64
        %v912 = vpop.permute.xlu0 %911
        %v914 = vmul.f32 %v898, %v912
        %916 = vrot.lane.b32.xlu0 %v914, 32
        %v917 = vpop.permute.xlu0 %916
        %v919 = vadd.f32 %v909, %v917
        %921 = vrot.lane.b32.xlu0 %v734, 32
        %v922 = vpop.permute.xlu0 %921
        %v924 = vmul.f32 %v903, %v922
        %926 = vrot.lane.b32.xlu0 %v904, 64
        %v927 = vpop.permute.xlu0 %926
        %v929 = vmul.f32 %v903, %v927
        %931 = vrot.lane.b32.xlu0 %v929, 32
        %v932 = vpop.permute.xlu0 %931
        %v934 = vadd.f32 %v924, %v932
        %v935 = vtanh.pop %v919
        %937 = vrot.lane.b32.xlu0 %v935, 64
        %v938 = vpop.permute.xlu0 %937
        %v940 = vmul.f32 %v898, %v938
        %v941 = vtanh.pop %v934
        %943 = vrot.lane.b32.xlu0 %v941, 64
        %v944 = vpop.permute.xlu0 %943
        %v946 = vmul.f32 %v903, %v944
        %948 = vrot.lane.b32.xlu0 %v940, 32
        %v949 = vpop.permute.xlu0 %948
        %951 = vst.msk [vmem:[%s479] sm:$0xff] %vm740, %v949
        %953 = vrot.lane.b32.xlu0 %v946, 32
        %v954 = vpop.permute.xlu0 %953
        %s956 = scalar_lea.vmem %s486, 24 [#allocation20]
        %957 = vst.msk [vmem:[%s956] sm:$0xff] %vm740, %v954
        %s958 = scalar_lea.vmem [#allocation2], 8
        %v959 = vld [vmem:[%s958] sm:$0xff]
        %v960 = vld [vmem:[#allocation14] sm:$0xff]
        %v961 = vld [vmem:[#allocation14 + $0x8] sm:$0xff]
        %v962 = vld [vmem:[#allocation14 + $0x10] sm:$0xff]
        %v963 = vld [vmem:[#allocation14 + $0x18] sm:$0xff]
        %v964 = vsel %vm740, %v949, 0
        %966 = vmatprep.subr.mxu0 0.0
        %967 = vmatpush1.msra.mxu0 0.0
        %968 = vmatprep.subr.mxu0 0.0
        %969 = vmatpush1.msra.mxu0 0.0
        %970 = vmatprep.subr.mxu0 0.0
        %971 = vmatpush1.msra.mxu0 0.0
        %972 = vmatprep.subr.mxu0 0.0
        %973 = vmatpush1.msra.mxu0 0.0
        %974 = vmatprep.subr.mxu0 0.0
        %975 = vmatpush1.msra.mxu0 0.0
        %976 = vmatprep.subr.mxu0 0.0
        %977 = vmatpush1.msra.mxu0 0.0
        %978 = vmatprep.subr.mxu0 0.0
        %979 = vmatpush1.msra.mxu0 0.0
        %980 = vmatprep.subr.mxu0 0.0
        %981 = vmatpush1.msra.mxu0 0.0
        %982 = vmatprep.subr.mxu0 0.0
        %983 = vmatpush1.msra.mxu0 0.0
        %984 = vmatprep.subr.mxu0 0.0
        %985 = vmatpush1.msra.mxu0 0.0
        %986 = vmatprep.subr.mxu0 0.0
        %987 = vmatpush1.msra.mxu0 0.0
        %988 = vmatprep.subr.mxu0 0.0
        %989 = vmatpush1.msra.mxu0 0.0
        %990 = vmatprep.subr.mxu0 0.0
        %991 = vmatpush1.msra.mxu0 %v963
        %992 = vmatprep.subr.mxu0 0.0
        %993 = vmatpush1.msra.mxu0 %v962
        %994 = vmatprep.subr.mxu0 0.0
        %995 = vmatpush1.msra.mxu0 %v961
        %996 = vmatprep.subr.mxu0 0.0
        %997 = vmatpush1.msra.mxu0 %v960
        %998 = vmatprep.subr.mxu0 0.0
        %999 = vmatpush2.msra.mxu0 0.0
        %1000 = vmatprep.subr.mxu0 0.0
        %1001 = vmatpush2.msra.mxu0 0.0
        %1002 = vmatprep.subr.mxu0 0.0
        %1003 = vmatpush2.msra.mxu0 0.0
        %1004 = vmatprep.subr.mxu0 0.0
        %1005 = vmatpush2.msra.mxu0 0.0
        %1006 = vmatprep.subr.mxu0 0.0
        %1007 = vmatpush2.msra.mxu0 0.0
        %1008 = vmatprep.subr.mxu0 0.0
        %1009 = vmatpush2.msra.mxu0 0.0
        %1010 = vmatprep.subr.mxu0 0.0
        %1011 = vmatpush2.msra.mxu0 0.0
        %1012 = vmatprep.subr.mxu0 0.0
        %1013 = vmatpush2.msra.mxu0 0.0
        %1014 = vmatprep.subr.mxu0 0.0
        %1015 = vmatpush2.msra.mxu0 0.0
        %1016 = vmatprep.subr.mxu0 0.0
        %1017 = vmatpush2.msra.mxu0 0.0
        %1018 = vmatprep.subr.mxu0 0.0
        %1019 = vmatpush2.msra.mxu0 0.0
        %1020 = vmatprep.subr.mxu0 0.0
        %1021 = vmatpush2.msra.mxu0 0.0
        %1022 = vmatprep.subr.mxu0 0.0
        %1023 = vmatpush2.msra.mxu0 0.0
        %1024 = vmatprep.subr.mxu0 0.0
        %1025 = vmatpush2.msra.mxu0 0.0
        %1026 = vmatprep.subr.mxu0 0.0
        %1027 = vmatpush2.msra.mxu0 0.0
        %1028 = vmatprep.subr.mxu0 0.0
        %1029 = vmatpush2.msra.mxu0 0.0
        %1030 = vmatprep.mubr.f32.mxu0 0.0
        %1031 = vmatmul.mubr.f32.gmra.mxu0 %v964
        %v1032 = vpop.f32.mrf.mxu0
        %v1033 = vadd.f32 0.0, %v1032
        %v1034 = vpop.f32.mrf.mxu0
        %1035 = vdwg.mxu0
        %v1036 = vadd.f32 %v959, %v1033
        %s1037 = scalar_lea.vmem [#allocation3], 16
        %v1038 = vld [vmem:[%s1037] sm:$0xff]
        %v1039 = vld [vmem:[#allocation17] sm:$0xff]
        %v1040 = vld [vmem:[#allocation17 + $0x8] sm:$0xff]
        %v1041 = vld [vmem:[#allocation17 + $0x10] sm:$0xff]
        %v1042 = vld [vmem:[#allocation17 + $0x18] sm:$0xff]
        %v1043 = vsel %vm740, %v954, 0
        %1045 = vmatprep.subr.mxu0 0.0
        %1046 = vmatpush1.msra.mxu0 0.0
        %1047 = vmatprep.subr.mxu0 0.0
        %1048 = vmatpush1.msra.mxu0 0.0
        %1049 = vmatprep.subr.mxu0 0.0
        %1050 = vmatpush1.msra.mxu0 0.0
        %1051 = vmatprep.subr.mxu0 0.0
        %1052 = vmatpush1.msra.mxu0 0.0
        %1053 = vmatprep.subr.mxu0 0.0
        %1054 = vmatpush1.msra.mxu0 0.0
        %1055 = vmatprep.subr.mxu0 0.0
        %1056 = vmatpush1.msra.mxu0 0.0
        %1057 = vmatprep.subr.mxu0 0.0
        %1058 = vmatpush1.msra.mxu0 0.0
        %1059 = vmatprep.subr.mxu0 0.0
        %1060 = vmatpush1.msra.mxu0 0.0
        %1061 = vmatprep.subr.mxu0 0.0
        %1062 = vmatpush1.msra.mxu0 0.0
        %1063 = vmatprep.subr.mxu0 0.0
        %1064 = vmatpush1.msra.mxu0 0.0
        %1065 = vmatprep.subr.mxu0 0.0
        %1066 = vmatpush1.msra.mxu0 0.0
        %1067 = vmatprep.subr.mxu0 0.0
        %1068 = vmatpush1.msra.mxu0 0.0
        %1069 = vmatprep.subr.mxu0 0.0
        %1070 = vmatpush1.msra.mxu0 %v1042
        %1071 = vmatprep.subr.mxu0 0.0
        %1072 = vmatpush1.msra.mxu0 %v1041
        %1073 = vmatprep.subr.mxu0 0.0
        %1074 = vmatpush1.msra.mxu0 %v1040
        %1075 = vmatprep.subr.mxu0 0.0
        %1076 = vmatpush1.msra.mxu0 %v1039
        %1077 = vmatprep.subr.mxu0 0.0
        %1078 = vmatpush2.msra.mxu0 0.0
        %1079 = vmatprep.subr.mxu0 0.0
        %1080 = vmatpush2.msra.mxu0 0.0
        %1081 = vmatprep.subr.mxu0 0.0
        %1082 = vmatpush2.msra.mxu0 0.0
        %1083 = vmatprep.subr.mxu0 0.0
        %1084 = vmatpush2.msra.mxu0 0.0
        %1085 = vmatprep.subr.mxu0 0.0
        %1086 = vmatpush2.msra.mxu0 0.0
        %1087 = vmatprep.subr.mxu0 0.0
        %1088 = vmatpush2.msra.mxu0 0.0
        %1089 = vmatprep.subr.mxu0 0.0
        %1090 = vmatpush2.msra.mxu0 0.0
        %1091 = vmatprep.subr.mxu0 0.0
        %1092 = vmatpush2.msra.mxu0 0.0
        %1093 = vmatprep.subr.mxu0 0.0
        %1094 = vmatpush2.msra.mxu0 0.0
        %1095 = vmatprep.subr.mxu0 0.0
        %1096 = vmatpush2.msra.mxu0 0.0
        %1097 = vmatprep.subr.mxu0 0.0
        %1098 = vmatpush2.msra.mxu0 0.0
        %1099 = vmatprep.subr.mxu0 0.0
        %1100 = vmatpush2.msra.mxu0 0.0
        %1101 = vmatprep.subr.mxu0 0.0
        %1102 = vmatpush2.msra.mxu0 0.0
        %1103 = vmatprep.subr.mxu0 0.0
        %1104 = vmatpush2.msra.mxu0 0.0
        %1105 = vmatprep.subr.mxu0 0.0
        %1106 = vmatpush2.msra.mxu0 0.0
        %1107 = vmatprep.subr.mxu0 0.0
        %1108 = vmatpush2.msra.mxu0 0.0
        %1109 = vmatprep.mubr.f32.mxu0 0.0
        %1110 = vmatmul.mubr.f32.gmra.mxu0 %v1043
        %v1111 = vpop.f32.mrf.mxu0
        %v1112 = vadd.f32 0.0, %v1111
        %v1113 = vpop.f32.mrf.mxu0
        %1114 = vdwg.mxu0
        %v1115 = vadd.f32 %v1038, %v1112
        %v1116 = vmul.f32 %v1036, 0.5
        %v1117 = vtanh.pop %v1116
        %v1118 = vadd.f32 %v1117, 1.0
        %v1119 = vmul.f32 %v1118, 0.5
        %v1120 = vtanh.pop %v1036
        %v1121 = vmul.f32 %v1115, 0.5
        %v1122 = vtanh.pop %v1121
        %v1123 = vadd.f32 %v1122, 1.0
        %v1124 = vmul.f32 %v1123, 0.5
        %v1125 = vtanh.pop %v1115
        %v1126 = vmul.f32 %v1119, %v919
        %1128 = vrot.lane.b32.xlu0 %v1120, 64
        %v1129 = vpop.permute.xlu0 %1128
        %v1131 = vmul.f32 %v1119, %v1129
        %1133 = vrot.lane.b32.xlu0 %v1131, 32
        %v1134 = vpop.permute.xlu0 %1133
        %v1136 = vadd.f32 %v1126, %v1134
        %v1137 = vmul.f32 %v1124, %v934
        %1139 = vrot.lane.b32.xlu0 %v1125, 64
        %v1140 = vpop.permute.xlu0 %1139
        %v1142 = vmul.f32 %v1124, %v1140
        %1144 = vrot.lane.b32.xlu0 %v1142, 32
        %v1145 = vpop.permute.xlu0 %1144
        %v1147 = vadd.f32 %v1137, %v1145
        %v1148 = vtanh.pop %v1136
        %1150 = vrot.lane.b32.xlu0 %v1148, 64
        %v1151 = vpop.permute.xlu0 %1150
        %v1153 = vmul.f32 %v1119, %v1151
        %v1154 = vtanh.pop %v1147
        %1156 = vrot.lane.b32.xlu0 %v1154, 64
        %v1157 = vpop.permute.xlu0 %1156
        %v1159 = vmul.f32 %v1124, %v1157
        %1161 = vrot.lane.b32.xlu0 %v1153, 32
        %v1162 = vpop.permute.xlu0 %1161
        %s1164 = scalar_lea.vmem %s479, 8 [#allocation19]
        %1165 = vst.msk [vmem:[%s1164] sm:$0xff] %vm740, %v1162
        %1167 = vrot.lane.b32.xlu0 %v1159, 32
        %v1168 = vpop.permute.xlu0 %1167
        %s1170 = scalar_lea.vmem %s486, 16 [#allocation20]
        %1171 = vst.msk [vmem:[%s1170] sm:$0xff] %vm740, %v1168
        %s1172 = scalar_lea.vmem [#allocation2], 16
        %v1173 = vld [vmem:[%s1172] sm:$0xff]
        %v1174 = vld [vmem:[#allocation14] sm:$0xff]
        %v1175 = vld [vmem:[#allocation14 + $0x8] sm:$0xff]
        %v1176 = vld [vmem:[#allocation14 + $0x10] sm:$0xff]
        %v1177 = vld [vmem:[#allocation14 + $0x18] sm:$0xff]
        %v1178 = vsel %vm740, %v1162, 0
        %1180 = vmatprep.subr.mxu0 0.0
        %1181 = vmatpush1.msra.mxu0 0.0
        %1182 = vmatprep.subr.mxu0 0.0
        %1183 = vmatpush1.msra.mxu0 0.0
        %1184 = vmatprep.subr.mxu0 0.0
        %1185 = vmatpush1.msra.mxu0 0.0
        %1186 = vmatprep.subr.mxu0 0.0
        %1187 = vmatpush1.msra.mxu0 0.0
        %1188 = vmatprep.subr.mxu0 0.0
        %1189 = vmatpush1.msra.mxu0 0.0
        %1190 = vmatprep.subr.mxu0 0.0
        %1191 = vmatpush1.msra.mxu0 0.0
        %1192 = vmatprep.subr.mxu0 0.0
        %1193 = vmatpush1.msra.mxu0 0.0
        %1194 = vmatprep.subr.mxu0 0.0
        %1195 = vmatpush1.msra.mxu0 0.0
        %1196 = vmatprep.subr.mxu0 0.0
        %1197 = vmatpush1.msra.mxu0 0.0
        %1198 = vmatprep.subr.mxu0 0.0
        %1199 = vmatpush1.msra.mxu0 0.0
        %1200 = vmatprep.subr.mxu0 0.0
        %1201 = vmatpush1.msra.mxu0 0.0
        %1202 = vmatprep.subr.mxu0 0.0
        %1203 = vmatpush1.msra.mxu0 0.0
        %1204 = vmatprep.subr.mxu0 0.0
        %1205 = vmatpush1.msra.mxu0 %v1177
        %1206 = vmatprep.subr.mxu0 0.0
        %1207 = vmatpush1.msra.mxu0 %v1176
        %1208 = vmatprep.subr.mxu0 0.0
        %1209 = vmatpush1.msra.mxu0 %v1175
        %1210 = vmatprep.subr.mxu0 0.0
        %1211 = vmatpush1.msra.mxu0 %v1174
        %1212 = vmatprep.subr.mxu0 0.0
        %1213 = vmatpush2.msra.mxu0 0.0
        %1214 = vmatprep.subr.mxu0 0.0
        %1215 = vmatpush2.msra.mxu0 0.0
        %1216 = vmatprep.subr.mxu0 0.0
        %1217 = vmatpush2.msra.mxu0 0.0
        %1218 = vmatprep.subr.mxu0 0.0
        %1219 = vmatpush2.msra.mxu0 0.0
        %1220 = vmatprep.subr.mxu0 0.0
        %1221 = vmatpush2.msra.mxu0 0.0
        %1222 = vmatprep.subr.mxu0 0.0
        %1223 = vmatpush2.msra.mxu0 0.0
        %1224 = vmatprep.subr.mxu0 0.0
        %1225 = vmatpush2.msra.mxu0 0.0
        %1226 = vmatprep.subr.mxu0 0.0
        %1227 = vmatpush2.msra.mxu0 0.0
        %1228 = vmatprep.subr.mxu0 0.0
        %1229 = vmatpush2.msra.mxu0 0.0
        %1230 = vmatprep.subr.mxu0 0.0
        %1231 = vmatpush2.msra.mxu0 0.0
        %1232 = vmatprep.subr.mxu0 0.0
        %1233 = vmatpush2.msra.mxu0 0.0
        %1234 = vmatprep.subr.mxu0 0.0
        %1235 = vmatpush2.msra.mxu0 0.0
        %1236 = vmatprep.subr.mxu0 0.0
        %1237 = vmatpush2.msra.mxu0 0.0
        %1238 = vmatprep.subr.mxu0 0.0
        %1239 = vmatpush2.msra.mxu0 0.0
        %1240 = vmatprep.subr.mxu0 0.0
        %1241 = vmatpush2.msra.mxu0 0.0
        %1242 = vmatprep.subr.mxu0 0.0
        %1243 = vmatpush2.msra.mxu0 0.0
        %1244 = vmatprep.mubr.f32.mxu0 0.0
        %1245 = vmatmul.mubr.f32.gmra.mxu0 %v1178
        %v1246 = vpop.f32.mrf.mxu0
        %v1247 = vadd.f32 0.0, %v1246
        %v1248 = vpop.f32.mrf.mxu0
        %1249 = vdwg.mxu0
        %v1250 = vadd.f32 %v1173, %v1247
        %s1251 = scalar_lea.vmem [#allocation3], 8
        %v1252 = vld [vmem:[%s1251] sm:$0xff]
        %v1253 = vld [vmem:[#allocation17] sm:$0xff]
        %v1254 = vld [vmem:[#allocation17 + $0x8] sm:$0xff]
        %v1255 = vld [vmem:[#allocation17 + $0x10] sm:$0xff]
        %v1256 = vld [vmem:[#allocation17 + $0x18] sm:$0xff]
        %v1257 = vsel %vm740, %v1168, 0
        %1259 = vmatprep.subr.mxu0 0.0
        %1260 = vmatpush1.msra.mxu0 0.0
        %1261 = vmatprep.subr.mxu0 0.0
        %1262 = vmatpush1.msra.mxu0 0.0
        %1263 = vmatprep.subr.mxu0 0.0
        %1264 = vmatpush1.msra.mxu0 0.0
        %1265 = vmatprep.subr.mxu0 0.0
        %1266 = vmatpush1.msra.mxu0 0.0
        %1267 = vmatprep.subr.mxu0 0.0
        %1268 = vmatpush1.msra.mxu0 0.0
        %1269 = vmatprep.subr.mxu0 0.0
        %1270 = vmatpush1.msra.mxu0 0.0
        %1271 = vmatprep.subr.mxu0 0.0
        %1272 = vmatpush1.msra.mxu0 0.0
        %1273 = vmatprep.subr.mxu0 0.0
        %1274 = vmatpush1.msra.mxu0 0.0
        %1275 = vmatprep.subr.mxu0 0.0
        %1276 = vmatpush1.msra.mxu0 0.0
        %1277 = vmatprep.subr.mxu0 0.0
        %1278 = vmatpush1.msra.mxu0 0.0
        %1279 = vmatprep.subr.mxu0 0.0
        %1280 = vmatpush1.msra.mxu0 0.0
        %1281 = vmatprep.subr.mxu0 0.0
        %1282 = vmatpush1.msra.mxu0 0.0
        %1283 = vmatprep.subr.mxu0 0.0
        %1284 = vmatpush1.msra.mxu0 %v1256
        %1285 = vmatprep.subr.mxu0 0.0
        %1286 = vmatpush1.msra.mxu0 %v1255
        %1287 = vmatprep.subr.mxu0 0.0
        %1288 = vmatpush1.msra.mxu0 %v1254
        %1289 = vmatprep.subr.mxu0 0.0
        %1290 = vmatpush1.msra.mxu0 %v1253
        %1291 = vmatprep.subr.mxu0 0.0
        %1292 = vmatpush2.msra.mxu0 0.0
        %1293 = vmatprep.subr.mxu0 0.0
        %1294 = vmatpush2.msra.mxu0 0.0
        %1295 = vmatprep.subr.mxu0 0.0
        %1296 = vmatpush2.msra.mxu0 0.0
        %1297 = vmatprep.subr.mxu0 0.0
        %1298 = vmatpush2.msra.mxu0 0.0
        %1299 = vmatprep.subr.mxu0 0.0
        %1300 = vmatpush2.msra.mxu0 0.0
        %1301 = vmatprep.subr.mxu0 0.0
        %1302 = vmatpush2.msra.mxu0 0.0
        %1303 = vmatprep.subr.mxu0 0.0
        %1304 = vmatpush2.msra.mxu0 0.0
        %1305 = vmatprep.subr.mxu0 0.0
        %1306 = vmatpush2.msra.mxu0 0.0
        %1307 = vmatprep.subr.mxu0 0.0
        %1308 = vmatpush2.msra.mxu0 0.0
        %1309 = vmatprep.subr.mxu0 0.0
        %1310 = vmatpush2.msra.mxu0 0.0
        %1311 = vmatprep.subr.mxu0 0.0
        %1312 = vmatpush2.msra.mxu0 0.0
        %1313 = vmatprep.subr.mxu0 0.0
        %1314 = vmatpush2.msra.mxu0 0.0
        %1315 = vmatprep.subr.mxu0 0.0
        %1316 = vmatpush2.msra.mxu0 0.0
        %1317 = vmatprep.subr.mxu0 0.0
        %1318 = vmatpush2.msra.mxu0 0.0
        %1319 = vmatprep.subr.mxu0 0.0
        %1320 = vmatpush2.msra.mxu0 0.0
        %1321 = vmatprep.subr.mxu0 0.0
        %1322 = vmatpush2.msra.mxu0 0.0
        %1323 = vmatprep.mubr.f32.mxu0 0.0
        %1324 = vmatmul.mubr.f32.gmra.mxu0 %v1257
        %v1325 = vpop.f32.mrf.mxu0
        %v1326 = vadd.f32 0.0, %v1325
        %v1327 = vpop.f32.mrf.mxu0
        %1328 = vdwg.mxu0
        %v1329 = vadd.f32 %v1252, %v1326
        %v1330 = vmul.f32 %v1250, 0.5
        %v1331 = vtanh.pop %v1330
        %v1332 = vadd.f32 %v1331, 1.0
        %v1333 = vmul.f32 %v1332, 0.5
        %v1334 = vtanh.pop %v1250
        %v1335 = vmul.f32 %v1329, 0.5
        %v1336 = vtanh.pop %v1335
        %v1337 = vadd.f32 %v1336, 1.0
        %v1338 = vmul.f32 %v1337, 0.5
        %v1339 = vtanh.pop %v1329
        %v1340 = vmul.f32 %v1333, %v1136
        %1342 = vrot.lane.b32.xlu0 %v1334, 64
        %v1343 = vpop.permute.xlu0 %1342
        %v1345 = vmul.f32 %v1333, %v1343
        %1347 = vrot.lane.b32.xlu0 %v1345, 32
        %v1348 = vpop.permute.xlu0 %1347
        %v1350 = vadd.f32 %v1340, %v1348
        %v1351 = vmul.f32 %v1338, %v1147
        %1353 = vrot.lane.b32.xlu0 %v1339, 64
        %v1354 = vpop.permute.xlu0 %1353
        %v1356 = vmul.f32 %v1338, %v1354
        %1358 = vrot.lane.b32.xlu0 %v1356, 32
        %v1359 = vpop.permute.xlu0 %1358
        %v1361 = vadd.f32 %v1351, %v1359
        %v1362 = vtanh.pop %v1350
        %1364 = vrot.lane.b32.xlu0 %v1362, 64
        %v1365 = vpop.permute.xlu0 %1364
        %v1367 = vmul.f32 %v1333, %v1365
        %v1368 = vtanh.pop %v1361
        %1370 = vrot.lane.b32.xlu0 %v1368, 64
        %v1371 = vpop.permute.xlu0 %1370
        %v1373 = vmul.f32 %v1338, %v1371
        %1375 = vrot.lane.b32.xlu0 %v1367, 32
        %v1376 = vpop.permute.xlu0 %1375
        %s1378 = scalar_lea.vmem %s479, 16 [#allocation19]
        %1379 = vst.msk [vmem:[%s1378] sm:$0xff] %vm740, %v1376
        %1381 = vrot.lane.b32.xlu0 %v1373, 32
        %v1382 = vpop.permute.xlu0 %1381
        %s1384 = scalar_lea.vmem %s486, 8 [#allocation20]
        %1385 = vst.msk [vmem:[%s1384] sm:$0xff] %vm740, %v1382
        %s1386 = scalar_lea.vmem [#allocation2], 24
        %v1387 = vld [vmem:[%s1386] sm:$0xff]
        %v1388 = vld [vmem:[#allocation14] sm:$0xff]
        %v1389 = vld [vmem:[#allocation14 + $0x8] sm:$0xff]
        %v1390 = vld [vmem:[#allocation14 + $0x10] sm:$0xff]
        %v1391 = vld [vmem:[#allocation14 + $0x18] sm:$0xff]
        %v1392 = vsel %vm740, %v1376, 0
        %1394 = vmatprep.subr.mxu0 0.0
        %1395 = vmatpush1.msra.mxu0 0.0
        %1396 = vmatprep.subr.mxu0 0.0
        %1397 = vmatpush1.msra.mxu0 0.0
        %1398 = vmatprep.subr.mxu0 0.0
        %1399 = vmatpush1.msra.mxu0 0.0
        %1400 = vmatprep.subr.mxu0 0.0
        %1401 = vmatpush1.msra.mxu0 0.0
        %1402 = vmatprep.subr.mxu0 0.0
        %1403 = vmatpush1.msra.mxu0 0.0
        %1404 = vmatprep.subr.mxu0 0.0
        %1405 = vmatpush1.msra.mxu0 0.0
        %1406 = vmatprep.subr.mxu0 0.0
        %1407 = vmatpush1.msra.mxu0 0.0
        %1408 = vmatprep.subr.mxu0 0.0
        %1409 = vmatpush1.msra.mxu0 0.0
        %1410 = vmatprep.subr.mxu0 0.0
        %1411 = vmatpush1.msra.mxu0 0.0
        %1412 = vmatprep.subr.mxu0 0.0
        %1413 = vmatpush1.msra.mxu0 0.0
        %1414 = vmatprep.subr.mxu0 0.0
        %1415 = vmatpush1.msra.mxu0 0.0
        %1416 = vmatprep.subr.mxu0 0.0
        %1417 = vmatpush1.msra.mxu0 0.0
        %1418 = vmatprep.subr.mxu0 0.0
        %1419 = vmatpush1.msra.mxu0 %v1391
        %1420 = vmatprep.subr.mxu0 0.0
        %1421 = vmatpush1.msra.mxu0 %v1390
        %1422 = vmatprep.subr.mxu0 0.0
        %1423 = vmatpush1.msra.mxu0 %v1389
        %1424 = vmatprep.subr.mxu0 0.0
        %1425 = vmatpush1.msra.mxu0 %v1388
        %1426 = vmatprep.subr.mxu0 0.0
        %1427 = vmatpush2.msra.mxu0 0.0
        %1428 = vmatprep.subr.mxu0 0.0
        %1429 = vmatpush2.msra.mxu0 0.0
        %1430 = vmatprep.subr.mxu0 0.0
        %1431 = vmatpush2.msra.mxu0 0.0
        %1432 = vmatprep.subr.mxu0 0.0
        %1433 = vmatpush2.msra.mxu0 0.0
        %1434 = vmatprep.subr.mxu0 0.0
        %1435 = vmatpush2.msra.mxu0 0.0
        %1436 = vmatprep.subr.mxu0 0.0
        %1437 = vmatpush2.msra.mxu0 0.0
        %1438 = vmatprep.subr.mxu0 0.0
        %1439 = vmatpush2.msra.mxu0 0.0
        %1440 = vmatprep.subr.mxu0 0.0
        %1441 = vmatpush2.msra.mxu0 0.0
        %1442 = vmatprep.subr.mxu0 0.0
        %1443 = vmatpush2.msra.mxu0 0.0
        %1444 = vmatprep.subr.mxu0 0.0
        %1445 = vmatpush2.msra.mxu0 0.0
        %1446 = vmatprep.subr.mxu0 0.0
        %1447 = vmatpush2.msra.mxu0 0.0
        %1448 = vmatprep.subr.mxu0 0.0
        %1449 = vmatpush2.msra.mxu0 0.0
        %1450 = vmatprep.subr.mxu0 0.0
        %1451 = vmatpush2.msra.mxu0 0.0
        %1452 = vmatprep.subr.mxu0 0.0
        %1453 = vmatpush2.msra.mxu0 0.0
        %1454 = vmatprep.subr.mxu0 0.0
        %1455 = vmatpush2.msra.mxu0 0.0
        %1456 = vmatprep.subr.mxu0 0.0
        %1457 = vmatpush2.msra.mxu0 0.0
        %1458 = vmatprep.mubr.f32.mxu0 0.0
        %1459 = vmatmul.mubr.f32.gmra.mxu0 %v1392
        %v1460 = vpop.f32.mrf.mxu0
        %v1461 = vadd.f32 0.0, %v1460
        %v1462 = vpop.f32.mrf.mxu0
        %1463 = vdwg.mxu0
        %v1464 = vadd.f32 %v1387, %v1461
        %v1465 = vld [vmem:[#allocation3] sm:$0xff]
        %v1466 = vld [vmem:[#allocation17] sm:$0xff]
        %v1467 = vld [vmem:[#allocation17 + $0x8] sm:$0xff]
        %v1468 = vld [vmem:[#allocation17 + $0x10] sm:$0xff]
        %v1469 = vld [vmem:[#allocation17 + $0x18] sm:$0xff]
        %v1470 = vsel %vm740, %v1382, 0
        %1472 = vmatprep.subr.mxu0 0.0
        %1473 = vmatpush1.msra.mxu0 0.0
        %1474 = vmatprep.subr.mxu0 0.0
        %1475 = vmatpush1.msra.mxu0 0.0
        %1476 = vmatprep.subr.mxu0 0.0
        %1477 = vmatpush1.msra.mxu0 0.0
        %1478 = vmatprep.subr.mxu0 0.0
        %1479 = vmatpush1.msra.mxu0 0.0
        %1480 = vmatprep.subr.mxu0 0.0
        %1481 = vmatpush1.msra.mxu0 0.0
        %1482 = vmatprep.subr.mxu0 0.0
        %1483 = vmatpush1.msra.mxu0 0.0
        %1484 = vmatprep.subr.mxu0 0.0
        %1485 = vmatpush1.msra.mxu0 0.0
        %1486 = vmatprep.subr.mxu0 0.0
        %1487 = vmatpush1.msra.mxu0 0.0
        %1488 = vmatprep.subr.mxu0 0.0
        %1489 = vmatpush1.msra.mxu0 0.0
        %1490 = vmatprep.subr.mxu0 0.0
        %1491 = vmatpush1.msra.mxu0 0.0
        %1492 = vmatprep.subr.mxu0 0.0
        %1493 = vmatpush1.msra.mxu0 0.0
        %1494 = vmatprep.subr.mxu0 0.0
        %1495 = vmatpush1.msra.mxu0 0.0
        %1496 = vmatprep.subr.mxu0 0.0
        %1497 = vmatpush1.msra.mxu0 %v1469
        %1498 = vmatprep.subr.mxu0 0.0
        %1499 = vmatpush1.msra.mxu0 %v1468
        %1500 = vmatprep.subr.mxu0 0.0
        %1501 = vmatpush1.msra.mxu0 %v1467
        %1502 = vmatprep.subr.mxu0 0.0
        %1503 = vmatpush1.msra.mxu0 %v1466
        %1504 = vmatprep.subr.mxu0 0.0
        %1505 = vmatpush2.msra.mxu0 0.0
        %1506 = vmatprep.subr.mxu0 0.0
        %1507 = vmatpush2.msra.mxu0 0.0
        %1508 = vmatprep.subr.mxu0 0.0
        %1509 = vmatpush2.msra.mxu0 0.0
        %1510 = vmatprep.subr.mxu0 0.0
        %1511 = vmatpush2.msra.mxu0 0.0
        %1512 = vmatprep.subr.mxu0 0.0
        %1513 = vmatpush2.msra.mxu0 0.0
        %1514 = vmatprep.subr.mxu0 0.0
        %1515 = vmatpush2.msra.mxu0 0.0
        %1516 = vmatprep.subr.mxu0 0.0
        %1517 = vmatpush2.msra.mxu0 0.0
        %1518 = vmatprep.subr.mxu0 0.0
        %1519 = vmatpush2.msra.mxu0 0.0
        %1520 = vmatprep.subr.mxu0 0.0
        %1521 = vmatpush2.msra.mxu0 0.0
        %1522 = vmatprep.subr.mxu0 0.0
        %1523 = vmatpush2.msra.mxu0 0.0
        %1524 = vmatprep.subr.mxu0 0.0
        %1525 = vmatpush2.msra.mxu0 0.0
        %1526 = vmatprep.subr.mxu0 0.0
        %1527 = vmatpush2.msra.mxu0 0.0
        %1528 = vmatprep.subr.mxu0 0.0
        %1529 = vmatpush2.msra.mxu0 0.0
        %1530 = vmatprep.subr.mxu0 0.0
        %1531 = vmatpush2.msra.mxu0 0.0
        %1532 = vmatprep.subr.mxu0 0.0
        %1533 = vmatpush2.msra.mxu0 0.0
        %1534 = vmatprep.subr.mxu0 0.0
        %1535 = vmatpush2.msra.mxu0 0.0
        %1536 = vmatprep.mubr.f32.mxu0 0.0
        %1537 = vmatmul.mubr.f32.gmra.mxu0 %v1470
        %v1538 = vpop.f32.mrf.mxu0
        %v1539 = vadd.f32 0.0, %v1538
        %v1540 = vpop.f32.mrf.mxu0
        %1541 = vdwg.mxu0
        %v1542 = vadd.f32 %v1465, %v1539
        %v1543 = vmul.f32 %v1464, 0.5
        %v1544 = vtanh.pop %v1543
        %v1545 = vadd.f32 %v1544, 1.0
        %v1546 = vmul.f32 %v1545, 0.5
        %v1547 = vtanh.pop %v1464
        %v1548 = vmul.f32 %v1542, 0.5
        %v1549 = vtanh.pop %v1548
        %v1550 = vadd.f32 %v1549, 1.0
        %v1551 = vmul.f32 %v1550, 0.5
        %v1552 = vtanh.pop %v1542
        %v1553 = vmul.f32 %v1546, %v1350
        %1555 = vrot.lane.b32.xlu0 %v1547, 64
        %v1556 = vpop.permute.xlu0 %1555
        %v1558 = vmul.f32 %v1546, %v1556
        %1560 = vrot.lane.b32.xlu0 %v1558, 32
        %v1561 = vpop.permute.xlu0 %1560
        %v1563 = vadd.f32 %v1553, %v1561
        %v1564 = vmul.f32 %v1551, %v1361
        %1566 = vrot.lane.b32.xlu0 %v1552, 64
        %v1567 = vpop.permute.xlu0 %1566
        %v1569 = vmul.f32 %v1551, %v1567
        %1571 = vrot.lane.b32.xlu0 %v1569, 32
        %v1572 = vpop.permute.xlu0 %1571
        %v1574 = vadd.f32 %v1564, %v1572
        %v1575 = vtanh.pop %v1563
        %1577 = vrot.lane.b32.xlu0 %v1575, 64
        %v1578 = vpop.permute.xlu0 %1577
        %v1580 = vmul.f32 %v1546, %v1578
        %v1581 = vtanh.pop %v1574
        %1583 = vrot.lane.b32.xlu0 %v1581, 64
        %v1584 = vpop.permute.xlu0 %1583
        %v1586 = vmul.f32 %v1551, %v1584
        %1588 = vrot.lane.b32.xlu0 %v1580, 32
        %v1589 = vpop.permute.xlu0 %1588
        %s1591 = scalar_lea.vmem %s479, 24 [#allocation19]
        %1592 = vst.msk [vmem:[%s1591] sm:$0xff] %vm740, %v1589
        %1594 = vrot.lane.b32.xlu0 %v1586, 32
        %v1595 = vpop.permute.xlu0 %1594
        %1597 = vst.msk [vmem:[%s486] sm:$0xff] %vm740, %v1595
        %1598 = vst.msk [vmem:[#allocation4] sm:$0xff] %vm740, %v1589
        %1600 = vrot.lane.b32.xlu0 %v1563, 96
        %v1601 = vpop.permute.xlu0 %1600
        %1603 = vst.msk [vmem:[#allocation5] sm:$0xff] %vm740, %v1601
        %1604 = vst.msk [vmem:[#allocation6] sm:$0xff] %vm740, %v1595
        %1606 = vrot.lane.b32.xlu0 %v1574, 96
        %v1607 = vpop.permute.xlu0 %1606
        %1609 = vst.msk [vmem:[#allocation7] sm:$0xff] %vm740, %v1607
        %s1610 = sand.u32 %s241, 1
        %s1611 = scalar_lea.sflag [#allocation10], %s1610
        %s1612 = sand.u32 %s241, 1
        %s1613 = smul.addr %s1612, 32
        %s1614 = scalar_lea.vmem [#allocation19], %s1613
        %s1615 = sand.u32 %s271, 1
        %s1616 = scalar_lea.sflag [#allocation21], %s1615
        %s1617 = sand.u32 %s271, 1
        %s1618 = smul.addr %s1617, 32
        %s1619 = scalar_lea.vmem [#allocation20], %s1618
        // Predicated region
        $region81: #{tpu_custom_call.1} parent=51 // pred_check
          %p1620 = pneg %p251
        $region82: #{tpu_custom_call.1} parent=51 // pred_check_branch
          %1622 = sbr.rel (%p1620) target = $region84
        $region83: #{tpu_custom_call.1} parent=51 // pred_region
          %s1623 = smul.u32 4, %s40
          %s1625 = ssub.s32 512, 512
          %1626 = vsyncadd %s1611, %s1625
          %s1627 = sadd.s32 %s39, %s1623
          %s1628 = smul.addr %s1627, 128
          %s1629 = scalar_lea.hbm %s8, %s1628
          %s1630 = sshll.u32 %s1614, 4
          %s1631 = int_to_ptr.vmem [resolvable:$true] %s1630
          %1636 = dma.vmem_to_hbm [thread:$0]  %s1631, 512, %s1629, %s1611, 128, 128, 8
        $region84: #{tpu_custom_call.1} parent=51 // pred_fallthru
          _
        // Predicated region
        $region85: #{tpu_custom_call.1} parent=51 // pred_check
          %p1637 = pneg %p281
        $region86: #{tpu_custom_call.1} parent=51 // pred_check_branch
          %1639 = sbr.rel (%p1637) target = $region88
        $region87: #{tpu_custom_call.1} parent=51 // pred_region
          %s1640 = ssub.s32 1, %s40
          %s1641 = smul.u32 4, %s1640
          %s1643 = ssub.s32 512, 512
          %1644 = vsyncadd %s1616, %s1643
          %s1645 = sadd.s32 %s39, %s1641
          %s1646 = smul.addr %s1645, 128
          %s1647 = scalar_lea.hbm %s9, %s1646
          %s1648 = sshll.u32 %s1619, 4
          %s1649 = int_to_ptr.vmem [resolvable:$true] %s1648
          %1654 = dma.vmem_to_hbm [thread:$0]  %s1649, 512, %s1647, %s1616, 128, 128, 8
        $region88: #{tpu_custom_call.1} parent=51 // pred_fallthru
          _
      $region52: #{tpu_custom_call.1} parent=5 // pred_fallthru
        _
      %p1655 = scmp.le.s32.totalorder 2, %s30
      // Predicated region
      $region89: #{tpu_custom_call.1} parent=5 // pred_check
        %p1656 = pneg %p1655
      $region90: #{tpu_custom_call.1} parent=5 // pred_check_branch
        %1658 = sbr.rel (%p1656) target = $region92
      $region91: #{tpu_custom_call.1} parent=5 // pred_region
        %s1659 = ssub.s32 %s30, 2
        // Predicated region
        $region93: #{tpu_custom_call.1} parent=91 // pred_check
          %p1660 = pneg %p257
        $region94: #{tpu_custom_call.1} parent=91 // pred_check_branch
          %1662 = sbr.rel (%p1660) target = $region96
        $region95: #{tpu_custom_call.1} parent=91 // pred_region
          %s1663 = sand.u32 %s242, 1
          %s1664 = scalar_lea.sflag [#allocation10], %s1663
          %s1665 = sand.u32 %s242, 1
          %s1666 = smul.addr %s1665, 32
          %s1667 = scalar_lea.vmem [#allocation19], %s1666
          %1668 = dma.done %s1664, 512
        $region96: #{tpu_custom_call.1} parent=91 // pred_fallthru
          _
        // Predicated region
        $region97: #{tpu_custom_call.1} parent=91 // pred_check
          %p1669 = pneg %p287
        $region98: #{tpu_custom_call.1} parent=91 // pred_check_branch
          %1671 = sbr.rel (%p1669) target = $region100
        $region99: #{tpu_custom_call.1} parent=91 // pred_region
          %s1672 = sand.u32 %s272, 1
          %s1673 = scalar_lea.sflag [#allocation21], %s1672
          %s1674 = sand.u32 %s272, 1
          %s1675 = smul.addr %s1674, 32
          %s1676 = scalar_lea.vmem [#allocation20], %s1675
          %1677 = dma.done %s1673, 512
        $region100: #{tpu_custom_call.1} parent=91 // pred_fallthru
          _
      $region92: #{tpu_custom_call.1} parent=5 // pred_fallthru
        _
    $region6: #{tpu_custom_call.1} parent=1 // loop_footer
      %s34 = sadd.s32 1, %s30
    $region7: #{tpu_custom_call.1} parent=1 // loop_footer_branch
      %29 = sbr.rel target = $region3
    $region8: #{tpu_custom_call.1} parent=1 // loop_exit
      _
    %1678 = vsyncpa [#allocation9], 1
    %s1679 = scalar_lea.sflag [#allocation9], 1
    %1680 = vsyncpa %s1679, 1
    %1681 = vsyncpa [#allocation12], 1
    %s1682 = scalar_lea.sflag [#allocation12], 1
    %1683 = vsyncpa %s1682, 1
    %1684 = vsyncpa [#allocation15], 1
    %1685 = vsyncpa [#allocation18], 1
    %1686 = vsyncpa [#allocation10], 1
    %s1687 = scalar_lea.sflag [#allocation10], 1
    %1688 = vsyncpa %s1687, 1
    %1689 = vsyncpa [#allocation21], 1
    %s1690 = scalar_lea.sflag [#allocation21], 1
    %1691 = vsyncpa %s1690, 1

</llo_original>
